<compile_context>
chip_gen: v7x
topology: tpu7x:2x2x1
jax: 0.10.0
libtpu: 0.0.40
codegen_flags: <defaults>
</compile_context>

<pallas_src>
import numpy as np
import jax
import jax.numpy as jnp
from jax.experimental import pallas as pl
from jax.experimental.pallas import tpu as pltpu


# ----------------------------- configuration -------------------------------
N = 16              # number of graph nodes (Conv1d length)
H = 32              # hidden_size  (GatedGNN output channels)
F = 96              # feature_size (node embedding dim)
C = H + F           # concat width = 128 (lanes 0..H-1 gnn, H..C-1 adj)
CH = H + C          # fused Y|Z channel width = 160
NUM_CLASSES = 2
PAD = 128           # lane-dense width of each fused head / of the output

BF = 8              # batch elements folded per grid step (tunable; 8 -> R=128
                    # fills v5e MXU rows, 16 -> R=256 for v6e/v7x)
R = BF * N          # stacked rows per grid step = 128

L_CONV1 = N - 2                      # Conv1d(k=3, valid):      16 -> 14
L_POOL1 = (L_CONV1 - 3) // 2 + 1     # MaxPool1d(3, stride=2):  14 -> 6
L_POOL2 = (L_POOL1 - 2) // 2 + 1     # MaxPool1d(2, stride=2):   6 -> 3

LC = R - 2          # conv-1 rows at full (stride-deferred) resolution = 126
LP1 = LC - 2        # pool-1 rows = 124
L_LOGIT = LP1 - 2   # pool-2 / head rows = 122

# Deferred-stride invariants: pooled position t of batch b lives at
# full-resolution row b*N + 4*t; it must never read across a batch boundary of
# the stacked layout and must exist inside the shrunken intermediate arrays.
assert 4 * (L_POOL2 - 1) + 4 <= L_CONV1 - 1, "pool window would cross a batch"
assert (BF - 1) * N + 4 * (L_POOL2 - 1) < L_LOGIT, "selected row out of range"


# ------------------------------- the kernel --------------------------------
def devign_head_kernel(xz_ref, w1_ref, b1_ref, w2_ref, b2_ref,
                       wh_ref, bh_ref, t_ref, out_ref):
    # --- fused conv_l1 / conv_l1_for_concat (kernel=3, valid) ----------------
    # One lane-dense K=128 bf16 matmul per tap; the tap shift rides on the
    # VMEM load (shifted row window of the input ref), not on a value relayout.
    m = jnp.dot(xz_ref[0:LC, :].astype(jnp.bfloat16), w1_ref[0],
                preferred_element_type=jnp.float32)
    m += jnp.dot(xz_ref[1:LC + 1, :].astype(jnp.bfloat16), w1_ref[1],
                 preferred_element_type=jnp.float32)
    m += jnp.dot(xz_ref[2:LC + 2, :].astype(jnp.bfloat16), w1_ref[2],
                 preferred_element_type=jnp.float32)
    c1 = jnp.maximum(m + b1_ref[...], 0.0)                        # [126, 160]

    # --- MaxPool1d(3, stride=2): full-resolution window max (stride deferred)
    p1 = jnp.maximum(jnp.maximum(c1[0:LP1], c1[1:LP1 + 1]), c1[2:LP1 + 2])

    # --- fused conv_l2 / conv_l2_for_concat (kernel=1) == block-diag matmul --
    c2 = jnp.maximum(
        jnp.dot(p1.astype(jnp.bfloat16), w2_ref[...],
                preferred_element_type=jnp.float32) + b2_ref[...], 0.0)

    # --- MaxPool1d(2, stride=2) at full resolution: rows i and i+2 -----------
    p2 = jnp.maximum(c2[0:L_LOGIT], c2[2:L_LOGIT + 2])             # [122, 160]

    # --- fused heads: logit = mlp_y(Y_2) * mlp_z(Z_2) -------------------------
    # single block-diagonal matmul; the two 128-lane halves hold the y / z
    # logits in lanes 0..1 (remaining lanes are exact zeros).
    lg = jnp.dot(p2.astype(jnp.bfloat16), wh_ref[...],
                 preferred_element_type=jnp.float32) + bh_ref[...]
    logit = lg[:, :PAD] * lg[:, PAD:]                              # [122, 128]

    # --- mean over pooled positions + per-batch row gather: ONE tiny matmul --
    # T[b, b*N + 4*t] = 1/L_POOL2.  Garbage rows of `logit` (windows that span
    # a batch boundary) are finite and hit exact zeros in T.  Pad to R rows so
    # the contraction dim is the aligned 128.
    logit_pad = jnp.concatenate(
        [logit, jnp.zeros((R - L_LOGIT, PAD), jnp.float32)], axis=0)
    pre = jnp.dot(t_ref[...], logit_pad, preferred_element_type=jnp.float32)
    out_ref[...] = jax.nn.sigmoid(pre)                             # [BF, 128]


# --------------------------- weight packing (one-time) ----------------------
def pack_params(p):
    """Pack PyTorch-layout weights into the fused, bf16, lane-padded layout.

    Call once at model-load time so the packing cost is off the inference path.
    """
    # conv-1: fused [3, C, CH]; input lanes [gnn | adj], output lanes [y | z].
    w1 = jnp.zeros((3, C, CH), jnp.float32)
    w1 = w1.at[:, :H, :H].set(p["w1y"])          # y branch reads gnn rows only
    w1 = w1.at[:, :, H:].set(p["w1z"])           # z branch reads all C rows
    b1 = jnp.concatenate([p["b1y"], p["b1z"]], axis=-1)            # [1, CH]

    # conv-2 (k=1): block diagonal.
    w2 = jnp.zeros((CH, CH), jnp.float32)
    w2 = w2.at[:H, :H].set(p["w2y"])
    w2 = w2.at[H:, H:].set(p["w2z"])
    b2 = jnp.concatenate([p["b2y"], p["b2z"]], axis=-1)            # [1, CH]

    # heads mlp_y (H->2) / mlp_z (C->2): block diagonal, each head padded to a
    # full 128-lane half so every downstream op / store is lane-dense.
    wh = jnp.zeros((CH, 2 * PAD), jnp.float32)
    wh = wh.at[:H, :NUM_CLASSES].set(p["wy"])
    wh = wh.at[H:, PAD:PAD + NUM_CLASSES].set(p["wz"])
    bh = jnp.zeros((1, 2 * PAD), jnp.float32)
    bh = bh.at[:, :NUM_CLASSES].set(p["by"])
    bh = bh.at[:, PAD:PAD + NUM_CLASSES].set(p["bz"])

    # selection / mean matrix for the epilogue matmul.
    t = np.zeros((BF, R), np.float32)
    for b in range(BF):
        for k in range(L_POOL2):
            t[b, b * N + 4 * k] = 1.0 / L_POOL2

    return {
        "w1": w1.astype(jnp.bfloat16), "b1": b1,
        "w2": w2.astype(jnp.bfloat16), "b2": b2,
        "wh": wh.astype(jnp.bfloat16), "bh": bh,
        "t": jnp.asarray(t),
    }


# ------------------------------- the wrapper --------------------------------
@jax.jit
def devign_head(gnn_out, adj_feature, packed):
    """gnn_out: [B, N, H], adj_feature: [B, N, F] -> prob [B, NUM_CLASSES]."""
    bt = gnn_out.shape[0]
    assert bt % BF == 0, "batch must be a multiple of the fold factor BF"
    steps = bt // BF

    # the torch `concat` tensor, with the batch folded onto rows (free reshape)
    xz = jnp.concatenate([gnn_out, adj_feature], axis=-1).reshape(bt * N, C)

    def fullspec(shape):
        nd = len(shape)
        return pl.BlockSpec(shape, lambda g, _nd=nd: (0,) * _nd)

    flops = steps * (2 * LC * C * CH * 3            # conv-1 (3 taps)
                     + 2 * LP1 * CH * CH            # conv-2
                     + 2 * L_LOGIT * CH * 2 * PAD   # fused heads
                     + 2 * BF * R * PAD)            # selection / mean matmul
    bytes_accessed = (bt * N * C * 4 + bt * PAD * 4
                      + 2 * (3 * C * CH + CH * CH + CH * 2 * PAD)   # bf16 weights
                      + 4 * (2 * CH + 2 * PAD + BF * R))            # f32 biases/T

    out = pl.pallas_call(
        devign_head_kernel,
        out_shape=jax.ShapeDtypeStruct((bt, PAD), jnp.float32),
        grid=(steps,),
        in_specs=[
            pl.BlockSpec((R, C), lambda g: (g, 0)),          # [gnn|adj] rows
            fullspec((3, C, CH)), fullspec((1, CH)),         # conv-1 (resident)
            fullspec((CH, CH)), fullspec((1, CH)),           # conv-2 (resident)
            fullspec((CH, 2 * PAD)), fullspec((1, 2 * PAD)), # heads   (resident)
            fullspec((BF, R)),                               # selection matrix
        ],
        out_specs=pl.BlockSpec((BF, PAD), lambda g: (g, 0)),
        compiler_params=pltpu.CompilerParams(
            dimension_semantics=("parallel",)),
        cost_estimate=pl.CostEstimate(
            flops=flops, transcendentals=bt * PAD,
            bytes_accessed=bytes_accessed),
    )(xz, packed["w1"], packed["b1"], packed["w2"], packed["b2"],
      packed["wh"], packed["bh"], packed["t"])

    return out[:, :NUM_CLASSES]


# --------------------------- pure-JAX reference -----------------------------
def ref_forward(gnn_out, adj_feature, params):
    def conv_block(x_ncl, w_kio, b, kpool, spool):
        # x_ncl: [B, Cin, L];  w_kio: [K, Cin, Cout] -> torch OIK layout
        w_oik = jnp.transpose(w_kio, (2, 1, 0))
        y = jax.lax.conv_general_dilated(
            x_ncl, w_oik, (1,), "VALID",
            dimension_numbers=("NCH", "OIH", "NCH"))
        y = jnp.maximum(y + b[0][None, :, None], 0.0)
        return jax.lax.reduce_window(
            y, -jnp.inf, jax.lax.max, (1, 1, kpool), (1, 1, spool), "VALID")

    concat = jnp.concatenate([gnn_out, adj_feature], axis=-1)
    y1 = conv_block(jnp.transpose(gnn_out, (0, 2, 1)), params["w1y"], params["b1y"], 3, 2)
    y2 = jnp.transpose(conv_block(y1, params["w2y"][None], params["b2y"], 2, 2), (0, 2, 1))
    z1 = conv_block(jnp.transpose(concat, (0, 2, 1)), params["w1z"], params["b1z"], 3, 2)
    z2 = jnp.transpose(conv_block(z1, params["w2z"][None], params["b2z"], 2, 2), (0, 2, 1))
    ly = jnp.matmul(y2, params["wy"]) + params["by"][0]
    lz = jnp.matmul(z2, params["wz"]) + params["bz"][0]
    return jax.nn.sigmoid(jnp.mean(ly * lz, axis=1))


# ---------------------------------- main -------------------------------------
if __name__ == "__main__":
    B = 16   # 2 grid steps of BF=8 -> both v7x TensorCores get work

    key = jax.random.PRNGKey(0)
    ks = jax.random.split(key, 16)

    def rnd(k, shape, scale=0.1):
        return scale * jax.random.normal(k, shape, dtype=jnp.float32)

    params = {
        "w1y": rnd(ks[0], (3, H, H)), "b1y": rnd(ks[1], (1, H)),
        "w2y": rnd(ks[2], (H, H)),    "b2y": rnd(ks[3], (1, H)),
        "w1z": rnd(ks[4], (3, C, C)), "b1z": rnd(ks[5], (1, C)),
        "w2z": rnd(ks[6], (C, C)),    "b2z": rnd(ks[7], (1, C)),
        "wy":  rnd(ks[8], (H, NUM_CLASSES)),  "by": rnd(ks[9], (1, NUM_CLASSES)),
        "wz":  rnd(ks[10], (C, NUM_CLASSES)), "bz": rnd(ks[11], (1, NUM_CLASSES)),
    }

    gnn_out = rnd(ks[12], (B, N, H), scale=1.0)       # stands in for self.gnn(...)
    adj_feature = rnd(ks[13], (B, N, F), scale=1.0)   # stands in for preprocess_features(...)

    packed = pack_params(params)                      # one-time weight packing

    prob = devign_head(gnn_out, adj_feature, packed)
    prob = jax.block_until_ready(prob)

    # reference uses the same bf16-rounded weights the kernel carries
    def q(x):
        return x.astype(jnp.bfloat16).astype(jnp.float32)

    wkeys = {"w1y", "w2y", "w1z", "w2z", "wy", "wz"}
    params_ref = {k: (q(v) if k in wkeys else v) for k, v in params.items()}
    prob_ref = ref_forward(gnn_out, adj_feature, params_ref)

    assert prob.shape == (B, NUM_CLASSES)
    assert jnp.allclose(prob, prob_ref, rtol=2e-2, atol=2e-2), (prob, prob_ref)

    print("KERNEL_OK")
</pallas_src>

<mosaic_0001>
module attributes {stable_mosaic.version = 11 : i64} {
  func.func @devign_head_kernel(%arg0: i32, %arg1: memref<128x128xf32, #tpu.memory_space<vmem>>, %arg2: memref<3x128x160xbf16, #tpu.memory_space<vmem>>, %arg3: memref<1x160xf32, #tpu.memory_space<vmem>>, %arg4: memref<160x160xbf16, #tpu.memory_space<vmem>>, %arg5: memref<1x160xf32, #tpu.memory_space<vmem>>, %arg6: memref<160x256xbf16, #tpu.memory_space<vmem>>, %arg7: memref<1x256xf32, #tpu.memory_space<vmem>>, %arg8: memref<8x128xf32, #tpu.memory_space<vmem>>, %arg9: memref<8x128xf32, #tpu.memory_space<vmem>>) attributes {dimension_semantics = [#tpu.dimension_semantics<parallel>], iteration_bounds = array<i64: 2>, scalar_prefetch = 0 : i64, scratch_operands = 0 : i64, tpu.core_type = #tpu.core_type<tc>, window_params = [{transform_indices = @transform_0, window_bounds = array<i64: 128, 128>}, {pipeline_mode = #tpu.pipeline_mode<synchronous>, transform_indices = @transform_1, window_bounds = array<i64: 3, 128, 160>}, {pipeline_mode = #tpu.pipeline_mode<synchronous>, transform_indices = @transform_2, window_bounds = array<i64: 1, 160>}, {pipeline_mode = #tpu.pipeline_mode<synchronous>, transform_indices = @transform_3, window_bounds = array<i64: 160, 160>}, {pipeline_mode = #tpu.pipeline_mode<synchronous>, transform_indices = @transform_4, window_bounds = array<i64: 1, 160>}, {pipeline_mode = #tpu.pipeline_mode<synchronous>, transform_indices = @transform_5, window_bounds = array<i64: 160, 256>}, {pipeline_mode = #tpu.pipeline_mode<synchronous>, transform_indices = @transform_6, window_bounds = array<i64: 1, 256>}, {pipeline_mode = #tpu.pipeline_mode<synchronous>, transform_indices = @transform_7, window_bounds = array<i64: 8, 128>}, {transform_indices = @transform_8, window_bounds = array<i64: 8, 128>}]} {
    %c0 = arith.constant 0 : index
    %c0_0 = arith.constant 0 : index
    %0 = vector.load %arg1[%c0, %c0_0] : memref<128x128xf32, #tpu.memory_space<vmem>>, vector<126x128xf32>
    %1 = arith.truncf %0 : vector<126x128xf32> to vector<126x128xbf16>
    %c0_1 = arith.constant 0 : index
    %c0_2 = arith.constant 0 : index
    %c0_3 = arith.constant 0 : index
    %2 = vector.load %arg2[%c0_1, %c0_2, %c0_3] : memref<3x128x160xbf16, #tpu.memory_space<vmem>>, vector<1x128x160xbf16>
    %3 = vector.shape_cast %2 : vector<1x128x160xbf16> to vector<128x160xbf16>
    %cst = arith.constant dense<0.000000e+00> : vector<126x160xf32>
    %4 = tpu.matmul %1, %3, %cst {dimension_numbers = #tpu.dot_dimension_numbers<[1], [0], [0], [1], [0, 0, 1, 1], [], []>} : vector<126x128xbf16>, vector<128x160xbf16>, vector<126x160xf32> -> vector<126x160xf32>
    %c1 = arith.constant 1 : index
    %c0_4 = arith.constant 0 : index
    %5 = vector.load %arg1[%c1, %c0_4] : memref<128x128xf32, #tpu.memory_space<vmem>>, vector<126x128xf32>
    %6 = arith.truncf %5 : vector<126x128xf32> to vector<126x128xbf16>
    %c1_5 = arith.constant 1 : index
    %c0_6 = arith.constant 0 : index
    %c0_7 = arith.constant 0 : index
    %7 = vector.load %arg2[%c1_5, %c0_6, %c0_7] : memref<3x128x160xbf16, #tpu.memory_space<vmem>>, vector<1x128x160xbf16>
    %8 = vector.shape_cast %7 : vector<1x128x160xbf16> to vector<128x160xbf16>
    %cst_8 = arith.constant dense<0.000000e+00> : vector<126x160xf32>
    %9 = tpu.matmul %6, %8, %cst_8 {dimension_numbers = #tpu.dot_dimension_numbers<[1], [0], [0], [1], [0, 0, 1, 1], [], []>} : vector<126x128xbf16>, vector<128x160xbf16>, vector<126x160xf32> -> vector<126x160xf32>
    %10 = arith.addf %4, %9 : vector<126x160xf32>
    %c2 = arith.constant 2 : index
    %c0_9 = arith.constant 0 : index
    %11 = vector.load %arg1[%c2, %c0_9] : memref<128x128xf32, #tpu.memory_space<vmem>>, vector<126x128xf32>
    %12 = arith.truncf %11 : vector<126x128xf32> to vector<126x128xbf16>
    %c2_10 = arith.constant 2 : index
    %c0_11 = arith.constant 0 : index
    %c0_12 = arith.constant 0 : index
    %13 = vector.load %arg2[%c2_10, %c0_11, %c0_12] : memref<3x128x160xbf16, #tpu.memory_space<vmem>>, vector<1x128x160xbf16>
    %14 = vector.shape_cast %13 : vector<1x128x160xbf16> to vector<128x160xbf16>
    %cst_13 = arith.constant dense<0.000000e+00> : vector<126x160xf32>
    %15 = tpu.matmul %12, %14, %cst_13 {dimension_numbers = #tpu.dot_dimension_numbers<[1], [0], [0], [1], [0, 0, 1, 1], [], []>} : vector<126x128xbf16>, vector<128x160xbf16>, vector<126x160xf32> -> vector<126x160xf32>
    %16 = arith.addf %10, %15 : vector<126x160xf32>
    %c0_14 = arith.constant 0 : index
    %c0_15 = arith.constant 0 : index
    %17 = vector.load %arg3[%c0_14, %c0_15] : memref<1x160xf32, #tpu.memory_space<vmem>>, vector<1x160xf32>
    %18 = vector.broadcast %17 : vector<1x160xf32> to vector<126x160xf32>
    %19 = arith.addf %16, %18 : vector<126x160xf32>
    %cst_16 = arith.constant 0.000000e+00 : f32
    %20 = vector.broadcast %cst_16 : f32 to vector<126x160xf32>
    %21 = arith.maximumf %19, %20 : vector<126x160xf32>
    %22 = vector.extract_strided_slice %21 {offsets = [0, 0], sizes = [124, 160], strides = [1, 1]} : vector<126x160xf32> to vector<124x160xf32>
    %23 = vector.extract_strided_slice %21 {offsets = [1, 0], sizes = [124, 160], strides = [1, 1]} : vector<126x160xf32> to vector<124x160xf32>
    %24 = arith.maximumf %22, %23 : vector<124x160xf32>
    %25 = vector.extract_strided_slice %21 {offsets = [2, 0], sizes = [124, 160], strides = [1, 1]} : vector<126x160xf32> to vector<124x160xf32>
    %26 = arith.maximumf %24, %25 : vector<124x160xf32>
    %27 = arith.truncf %26 : vector<124x160xf32> to vector<124x160xbf16>
    %c0_17 = arith.constant 0 : index
    %c0_18 = arith.constant 0 : index
    %28 = vector.load %arg4[%c0_17, %c0_18] : memref<160x160xbf16, #tpu.memory_space<vmem>>, vector<160x160xbf16>
    %cst_19 = arith.constant dense<0.000000e+00> : vector<124x160xf32>
    %29 = tpu.matmul %27, %28, %cst_19 {dimension_numbers = #tpu.dot_dimension_numbers<[1], [0], [0], [1], [0, 0, 1, 1], [], []>} : vector<124x160xbf16>, vector<160x160xbf16>, vector<124x160xf32> -> vector<124x160xf32>
    %c0_20 = arith.constant 0 : index
    %c0_21 = arith.constant 0 : index
    %30 = vector.load %arg5[%c0_20, %c0_21] : memref<1x160xf32, #tpu.memory_space<vmem>>, vector<1x160xf32>
    %31 = vector.broadcast %30 : vector<1x160xf32> to vector<124x160xf32>
    %32 = arith.addf %29, %31 : vector<124x160xf32>
    %cst_22 = arith.constant 0.000000e+00 : f32
    %33 = vector.broadcast %cst_22 : f32 to vector<124x160xf32>
    %34 = arith.maximumf %32, %33 : vector<124x160xf32>
    %35 = vector.extract_strided_slice %34 {offsets = [0, 0], sizes = [122, 160], strides = [1, 1]} : vector<124x160xf32> to vector<122x160xf32>
    %36 = vector.extract_strided_slice %34 {offsets = [2, 0], sizes = [122, 160], strides = [1, 1]} : vector<124x160xf32> to vector<122x160xf32>
    %37 = arith.maximumf %35, %36 : vector<122x160xf32>
    %38 = arith.truncf %37 : vector<122x160xf32> to vector<122x160xbf16>
    %c0_23 = arith.constant 0 : index
    %c0_24 = arith.constant 0 : index
    %39 = vector.load %arg6[%c0_23, %c0_24] : memref<160x256xbf16, #tpu.memory_space<vmem>>, vector<160x256xbf16>
    %cst_25 = arith.constant dense<0.000000e+00> : vector<122x256xf32>
    %40 = tpu.matmul %38, %39, %cst_25 {dimension_numbers = #tpu.dot_dimension_numbers<[1], [0], [0], [1], [0, 0, 1, 1], [], []>} : vector<122x160xbf16>, vector<160x256xbf16>, vector<122x256xf32> -> vector<122x256xf32>
    %c0_26 = arith.constant 0 : index
    %c0_27 = arith.constant 0 : index
    %41 = vector.load %arg7[%c0_26, %c0_27] : memref<1x256xf32, #tpu.memory_space<vmem>>, vector<1x256xf32>
    %42 = vector.broadcast %41 : vector<1x256xf32> to vector<122x256xf32>
    %43 = arith.addf %40, %42 : vector<122x256xf32>
    %44 = vector.extract_strided_slice %43 {offsets = [0, 0], sizes = [122, 128], strides = [1, 1]} : vector<122x256xf32> to vector<122x128xf32>
    %45 = vector.extract_strided_slice %43 {offsets = [0, 128], sizes = [122, 128], strides = [1, 1]} : vector<122x256xf32> to vector<122x128xf32>
    %46 = arith.mulf %44, %45 : vector<122x128xf32>
    %cst_28 = arith.constant 0.000000e+00 : f32
    %47 = vector.broadcast %cst_28 : f32 to vector<6x128xf32>
    %48 = tpu.concatenate %46, %47 in 0 : vector<122x128xf32>, vector<6x128xf32> -> vector<128x128xf32>
    %c0_29 = arith.constant 0 : index
    %c0_30 = arith.constant 0 : index
    %49 = vector.load %arg8[%c0_29, %c0_30] : memref<8x128xf32, #tpu.memory_space<vmem>>, vector<8x128xf32>
    %cst_31 = arith.constant dense<0.000000e+00> : vector<8x128xf32>
    %50 = tpu.matmul %49, %48, %cst_31 {dimension_numbers = #tpu.dot_dimension_numbers<[1], [0], [0], [1], [0, 0, 1, 1], [], []>} : vector<8x128xf32>, vector<128x128xf32>, vector<8x128xf32> -> vector<8x128xf32>
    %51 = arith.negf %50 : vector<8x128xf32>
    %52 = math.exp %51 : vector<8x128xf32>
    %cst_32 = arith.constant 1.000000e+00 : f32
    %53 = vector.broadcast %cst_32 : f32 to vector<8x128xf32>
    %54 = arith.addf %53, %52 : vector<8x128xf32>
    %55 = arith.divf %53, %54 : vector<8x128xf32>
    %c0_33 = arith.constant 0 : index
    %c0_34 = arith.constant 0 : index
    %56 = vector.load %arg9[%c0_33, %c0_34] : memref<8x128xf32, #tpu.memory_space<vmem>>, vector<8x128xf32>
    tpu.vector_store %arg9[%c0_33, %c0_34], %55 {strides = array<i32>} : memref<8x128xf32, #tpu.memory_space<vmem>>, vector<8x128xf32>,
    return
  }
  func.func @transform_0(%arg0: i32) -> (i32, i32) {
    %c0_i32 = arith.constant 0 : i32
    %c0_i32_0 = arith.constant 0 : i32
    return %arg0, %c0_i32 : i32, i32
  }
  func.func @transform_1(%arg0: i32) -> (i32, i32, i32) {
    %c0_i32 = arith.constant 0 : i32
    %c0_i32_0 = arith.constant 0 : i32
    %c0_i32_1 = arith.constant 0 : i32
    %c0_i32_2 = arith.constant 0 : i32
    return %c0_i32, %c0_i32_0, %c0_i32_1 : i32, i32, i32
  }
  func.func @transform_2(%arg0: i32) -> (i32, i32) {
    %c0_i32 = arith.constant 0 : i32
    %c0_i32_0 = arith.constant 0 : i32
    %c0_i32_1 = arith.constant 0 : i32
    return %c0_i32, %c0_i32_0 : i32, i32
  }
  func.func @transform_3(%arg0: i32) -> (i32, i32) {
    %c0_i32 = arith.constant 0 : i32
    %c0_i32_0 = arith.constant 0 : i32
    %c0_i32_1 = arith.constant 0 : i32
    return %c0_i32, %c0_i32_0 : i32, i32
  }
  func.func @transform_4(%arg0: i32) -> (i32, i32) {
    %c0_i32 = arith.constant 0 : i32
    %c0_i32_0 = arith.constant 0 : i32
    %c0_i32_1 = arith.constant 0 : i32
    return %c0_i32, %c0_i32_0 : i32, i32
  }
  func.func @transform_5(%arg0: i32) -> (i32, i32) {
    %c0_i32 = arith.constant 0 : i32
    %c0_i32_0 = arith.constant 0 : i32
    %c0_i32_1 = arith.constant 0 : i32
    return %c0_i32, %c0_i32_0 : i32, i32
  }
  func.func @transform_6(%arg0: i32) -> (i32, i32) {
    %c0_i32 = arith.constant 0 : i32
    %c0_i32_0 = arith.constant 0 : i32
    %c0_i32_1 = arith.constant 0 : i32
    return %c0_i32, %c0_i32_0 : i32, i32
  }
  func.func @transform_7(%arg0: i32) -> (i32, i32) {
    %c0_i32 = arith.constant 0 : i32
    %c0_i32_0 = arith.constant 0 : i32
    %c0_i32_1 = arith.constant 0 : i32
    return %c0_i32, %c0_i32_0 : i32, i32
  }
  func.func @transform_8(%arg0: i32) -> (i32, i32) {
    %c0_i32 = arith.constant 0 : i32
    %c0_i32_0 = arith.constant 0 : i32
    return %arg0, %c0_i32 : i32, i32
  }
}

</mosaic_0001>

<llo_original>
// kernel: devign_head.1
$region0: #{devign_head.1}
  #allocation0 [shape = 'u32[]', space=smem, size = 0x4, offset = 0x4, fixed_abs, tag = 'smem constant byte address 0x4 - core index']
  #allocation1 [shape = 'u32[144,128]{1,0:T(1,128)}', space=vmem, size = 0x12000, scoped, tag = 'internal scratch']
  %s0 = inlined_call_operand.vmem [shape: f32[256,128], index: 0, kind: input, shape index: {}]
  %s1 = inlined_call_operand.vmem [shape: bf16[3,128,160], index: 1, kind: input, shape index: {}]
  %s2 = inlined_call_operand.vmem [shape: f32[1,160], index: 2, kind: input, shape index: {}]
  %s3 = inlined_call_operand.vmem [shape: bf16[160,160], index: 3, kind: input, shape index: {}]
  %s4 = inlined_call_operand.vmem [shape: f32[1,160], index: 4, kind: input, shape index: {}]
  %s5 = inlined_call_operand.vmem [shape: bf16[160,256], index: 5, kind: input, shape index: {}]
  %s6 = inlined_call_operand.vmem [shape: f32[1,256], index: 6, kind: input, shape index: {}]
  %s7 = inlined_call_operand.vmem [shape: f32[8,128], index: 7, kind: input, shape index: {}]
  %s8 = inlined_call_operand.vmem [shape: f32[16,128], index: 8, kind: output, shape index: {}]
  %s9 = sld [smem:[#allocation0]]
  $region65: #{devign_head.1} parent=0
    _
  %s11 = ssub.s32 1, %s9
  %s12 = scalar_select 0, %s11, %s9
  loop: start=0, step=1, limit=4
  $region2: #{devign_head.1} parent=0 // loop_pre_header
    _
  $region3: #{devign_head.1} parent=0 // loop_header
    %s14 = sphi 0, %s18
    %p15 = scmp.ge.s32.totalorder %s14, 4
    %s24 = sphi 0, %s26
    %s27 = sphi 0, %s24
    %s28 = sphi 0, %s27
    %s44 = sphi 0, %s28
    %s48 = sphi 0, %s48
    %s50 = sphi 0, %s48
    %s51 = sphi 0, %s50
    %s65 = sphi 0, %s51
    %s69 = sphi 0, %s69
    %s71 = sphi 0, %s69
    %s72 = sphi 0, %s71
    %s86 = sphi 0, %s72
    %s90 = sphi 0, %s90
    %s92 = sphi 0, %s90
    %s93 = sphi 0, %s92
    %s107 = sphi 0, %s93
    %s111 = sphi 0, %s111
    %s113 = sphi 0, %s111
    %s114 = sphi 0, %s113
    %s128 = sphi 0, %s114
    %s132 = sphi 0, %s132
    %s134 = sphi 0, %s132
    %s135 = sphi 0, %s134
    %s149 = sphi 0, %s135
    %s153 = sphi 0, %s153
    %s155 = sphi 0, %s153
    %s156 = sphi 0, %s155
    %s170 = sphi 0, %s156
    %s174 = sphi 0, %s174
    %s176 = sphi 0, %s174
    %s177 = sphi 0, %s176
    %s191 = sphi 0, %s177
    %s197 = sphi 0, %s199
    %s200 = sphi 0, %s197
    %s201 = sphi 0, %s200
    %s217 = sphi 0, %s201
  $region4: #{devign_head.1} parent=0 // loop_header_branch
    %17 = sbr.rel (%p15) target = $region8
  $region5: #{devign_head.1} parent=0 // loop_body
    %s19 = ssub.s32 %s14, 1
    %s20 = ssub.s32 %s14, 2
    %s21 = sadd.s32 %s14, 1
    %s22 = ssub.s32 %s14, %s21
    %p23 = scmp.eq.s32.totalorder %s22, 0
    %s25 = sadd.s32 %s24, 1
    %s26 = scalar_select %p23, %s24, %s25
    %p29 = pneg %p23
    %p30 = scmp.eq.s32.totalorder %s14, 1
    %p31 = por %p29, %p30
    %p32 = scmp.ne.s32.totalorder %s24, %s27
    %p33 = scmp.eq.s32.totalorder %s14, 0
    %p34 = por %p32, %p33
    %p35 = scmp.ne.s32.totalorder %s24, %s27
    %p36 = scmp.eq.s32.totalorder %s19, 1
    %p37 = por %p35, %p36
    %p38 = scmp.ne.s32.totalorder %s27, %s28
    %p39 = scmp.eq.s32.totalorder %s19, 0
    %p40 = por %p38, %p39
    %p41 = scmp.ne.s32.totalorder %s27, %s28
    %p42 = scmp.eq.s32.totalorder %s20, 1
    %p43 = por %p41, %p42
    %p45 = scmp.ne.s32.totalorder %s28, %s44
    %p46 = scmp.eq.s32.totalorder %s20, 0
    %p47 = por %p45, %p46
    %s49 = sadd.s32 %s48, 1
    %p52 = scmp.eq.s32.totalorder %s14, 1
    %p53 = scmp.ne.s32.totalorder %s48, %s50
    %p54 = scmp.eq.s32.totalorder %s14, 0
    %p55 = por %p53, %p54
    %p56 = scmp.ne.s32.totalorder %s48, %s50
    %p57 = scmp.eq.s32.totalorder %s19, 1
    %p58 = por %p56, %p57
    %p59 = scmp.ne.s32.totalorder %s50, %s51
    %p60 = scmp.eq.s32.totalorder %s19, 0
    %p61 = por %p59, %p60
    %p62 = scmp.ne.s32.totalorder %s50, %s51
    %p63 = scmp.eq.s32.totalorder %s20, 1
    %p64 = por %p62, %p63
    %p66 = scmp.ne.s32.totalorder %s51, %s65
    %p67 = scmp.eq.s32.totalorder %s20, 0
    %p68 = por %p66, %p67
    %s70 = sadd.s32 %s69, 1
    %p73 = scmp.eq.s32.totalorder %s14, 1
    %p74 = scmp.ne.s32.totalorder %s69, %s71
    %p75 = scmp.eq.s32.totalorder %s14, 0
    %p76 = por %p74, %p75
    %p77 = scmp.ne.s32.totalorder %s69, %s71
    %p78 = scmp.eq.s32.totalorder %s19, 1
    %p79 = por %p77, %p78
    %p80 = scmp.ne.s32.totalorder %s71, %s72
    %p81 = scmp.eq.s32.totalorder %s19, 0
    %p82 = por %p80, %p81
    %p83 = scmp.ne.s32.totalorder %s71, %s72
    %p84 = scmp.eq.s32.totalorder %s20, 1
    %p85 = por %p83, %p84
    %p87 = scmp.ne.s32.totalorder %s72, %s86
    %p88 = scmp.eq.s32.totalorder %s20, 0
    %p89 = por %p87, %p88
    %s91 = sadd.s32 %s90, 1
    %p94 = scmp.eq.s32.totalorder %s14, 1
    %p95 = scmp.ne.s32.totalorder %s90, %s92
    %p96 = scmp.eq.s32.totalorder %s14, 0
    %p97 = por %p95, %p96
    %p98 = scmp.ne.s32.totalorder %s90, %s92
    %p99 = scmp.eq.s32.totalorder %s19, 1
    %p100 = por %p98, %p99
    %p101 = scmp.ne.s32.totalorder %s92, %s93
    %p102 = scmp.eq.s32.totalorder %s19, 0
    %p103 = por %p101, %p102
    %p104 = scmp.ne.s32.totalorder %s92, %s93
    %p105 = scmp.eq.s32.totalorder %s20, 1
    %p106 = por %p104, %p105
    %p108 = scmp.ne.s32.totalorder %s93, %s107
    %p109 = scmp.eq.s32.totalorder %s20, 0
    %p110 = por %p108, %p109
    %s112 = sadd.s32 %s111, 1
    %p115 = scmp.eq.s32.totalorder %s14, 1
    %p116 = scmp.ne.s32.totalorder %s111, %s113
    %p117 = scmp.eq.s32.totalorder %s14, 0
    %p118 = por %p116, %p117
    %p119 = scmp.ne.s32.totalorder %s111, %s113
    %p120 = scmp.eq.s32.totalorder %s19, 1
    %p121 = por %p119, %p120
    %p122 = scmp.ne.s32.totalorder %s113, %s114
    %p123 = scmp.eq.s32.totalorder %s19, 0
    %p124 = por %p122, %p123
    %p125 = scmp.ne.s32.totalorder %s113, %s114
    %p126 = scmp.eq.s32.totalorder %s20, 1
    %p127 = por %p125, %p126
    %p129 = scmp.ne.s32.totalorder %s114, %s128
    %p130 = scmp.eq.s32.totalorder %s20, 0
    %p131 = por %p129, %p130
    %s133 = sadd.s32 %s132, 1
    %p136 = scmp.eq.s32.totalorder %s14, 1
    %p137 = scmp.ne.s32.totalorder %s132, %s134
    %p138 = scmp.eq.s32.totalorder %s14, 0
    %p139 = por %p137, %p138
    %p140 = scmp.ne.s32.totalorder %s132, %s134
    %p141 = scmp.eq.s32.totalorder %s19, 1
    %p142 = por %p140, %p141
    %p143 = scmp.ne.s32.totalorder %s134, %s135
    %p144 = scmp.eq.s32.totalorder %s19, 0
    %p145 = por %p143, %p144
    %p146 = scmp.ne.s32.totalorder %s134, %s135
    %p147 = scmp.eq.s32.totalorder %s20, 1
    %p148 = por %p146, %p147
    %p150 = scmp.ne.s32.totalorder %s135, %s149
    %p151 = scmp.eq.s32.totalorder %s20, 0
    %p152 = por %p150, %p151
    %s154 = sadd.s32 %s153, 1
    %p157 = scmp.eq.s32.totalorder %s14, 1
    %p158 = scmp.ne.s32.totalorder %s153, %s155
    %p159 = scmp.eq.s32.totalorder %s14, 0
    %p160 = por %p158, %p159
    %p161 = scmp.ne.s32.totalorder %s153, %s155
    %p162 = scmp.eq.s32.totalorder %s19, 1
    %p163 = por %p161, %p162
    %p164 = scmp.ne.s32.totalorder %s155, %s156
    %p165 = scmp.eq.s32.totalorder %s19, 0
    %p166 = por %p164, %p165
    %p167 = scmp.ne.s32.totalorder %s155, %s156
    %p168 = scmp.eq.s32.totalorder %s20, 1
    %p169 = por %p167, %p168
    %p171 = scmp.ne.s32.totalorder %s156, %s170
    %p172 = scmp.eq.s32.totalorder %s20, 0
    %p173 = por %p171, %p172
    %s175 = sadd.s32 %s174, 1
    %p178 = scmp.eq.s32.totalorder %s14, 1
    %p179 = scmp.ne.s32.totalorder %s174, %s176
    %p180 = scmp.eq.s32.totalorder %s14, 0
    %p181 = por %p179, %p180
    %p182 = scmp.ne.s32.totalorder %s174, %s176
    %p183 = scmp.eq.s32.totalorder %s19, 1
    %p184 = por %p182, %p183
    %p185 = scmp.ne.s32.totalorder %s176, %s177
    %p186 = scmp.eq.s32.totalorder %s19, 0
    %p187 = por %p185, %p186
    %p188 = scmp.ne.s32.totalorder %s176, %s177
    %p189 = scmp.eq.s32.totalorder %s20, 1
    %p190 = por %p188, %p189
    %p192 = scmp.ne.s32.totalorder %s177, %s191
    %p193 = scmp.eq.s32.totalorder %s20, 0
    %p194 = por %p192, %p193
    %s195 = ssub.s32 %s14, %s21
    %p196 = scmp.eq.s32.totalorder %s195, 0
    %s198 = sadd.s32 %s197, 1
    %s199 = scalar_select %p196, %s197, %s198
    %p202 = pneg %p196
    %p203 = scmp.eq.s32.totalorder %s14, 1
    %p204 = por %p202, %p203
    %p205 = scmp.ne.s32.totalorder %s197, %s200
    %p206 = scmp.eq.s32.totalorder %s14, 0
    %p207 = por %p205, %p206
    %p208 = scmp.ne.s32.totalorder %s197, %s200
    %p209 = scmp.eq.s32.totalorder %s19, 1
    %p210 = por %p208, %p209
    %p211 = scmp.ne.s32.totalorder %s200, %s201
    %p212 = scmp.eq.s32.totalorder %s19, 0
    %p213 = por %p211, %p212
    %p214 = scmp.ne.s32.totalorder %s200, %s201
    %p215 = scmp.eq.s32.totalorder %s20, 1
    %p216 = por %p214, %p215
    %p218 = scmp.ne.s32.totalorder %s201, %s217
    %p219 = scmp.eq.s32.totalorder %s20, 0
    %p220 = por %p218, %p219
    %p221 = scmp.le.s32.totalorder 1, %s14
    %p222 = scmp.lt.s32.totalorder %s14, 3
    %p223 = pnand %p221, %p222
    %p224 = pneg %p223
    // Predicated region
    $region9: #{devign_head.1} parent=5 // pred_check
      _
    $region10: #{devign_head.1} parent=5 // pred_check_branch
      %226 = sbr.rel (%p223) target = $region12
    $region11: #{devign_head.1} parent=5 // pred_region
      %s227 = ssub.s32 %s14, 1
      // Predicated region
      $region13: #{devign_head.1} parent=11 // pred_check
        %p228 = pneg %p61
      $region14: #{devign_head.1} parent=11 // pred_check_branch
        %230 = sbr.rel (%p228) target = $region16
      $region15: #{devign_head.1} parent=11 // pred_region
        _
      $region16: #{devign_head.1} parent=11 // pred_fallthru
        _
      // Predicated region
      $region17: #{devign_head.1} parent=11 // pred_check
        %p231 = pneg %p82
      $region18: #{devign_head.1} parent=11 // pred_check_branch
        %233 = sbr.rel (%p231) target = $region20
      $region19: #{devign_head.1} parent=11 // pred_region
        _
      $region20: #{devign_head.1} parent=11 // pred_fallthru
        _
      // Predicated region
      $region21: #{devign_head.1} parent=11 // pred_check
        %p234 = pneg %p103
      $region22: #{devign_head.1} parent=11 // pred_check_branch
        %236 = sbr.rel (%p234) target = $region24
      $region23: #{devign_head.1} parent=11 // pred_region
        _
      $region24: #{devign_head.1} parent=11 // pred_fallthru
        _
      // Predicated region
      $region25: #{devign_head.1} parent=11 // pred_check
        %p237 = pneg %p124
      $region26: #{devign_head.1} parent=11 // pred_check_branch
        %239 = sbr.rel (%p237) target = $region28
      $region27: #{devign_head.1} parent=11 // pred_region
        _
      $region28: #{devign_head.1} parent=11 // pred_fallthru
        _
      // Predicated region
      $region29: #{devign_head.1} parent=11 // pred_check
        %p240 = pneg %p145
      $region30: #{devign_head.1} parent=11 // pred_check_branch
        %242 = sbr.rel (%p240) target = $region32
      $region31: #{devign_head.1} parent=11 // pred_region
        _
      $region32: #{devign_head.1} parent=11 // pred_fallthru
        _
      // Predicated region
      $region33: #{devign_head.1} parent=11 // pred_check
        %p243 = pneg %p166
      $region34: #{devign_head.1} parent=11 // pred_check_branch
        %245 = sbr.rel (%p243) target = $region36
      $region35: #{devign_head.1} parent=11 // pred_region
        _
      $region36: #{devign_head.1} parent=11 // pred_fallthru
        _
      // Predicated region
      $region37: #{devign_head.1} parent=11 // pred_check
        %p246 = pneg %p187
      $region38: #{devign_head.1} parent=11 // pred_check_branch
        %248 = sbr.rel (%p246) target = $region40
      $region39: #{devign_head.1} parent=11 // pred_region
        _
      $region40: #{devign_head.1} parent=11 // pred_fallthru
        _
    $region12: #{devign_head.1} parent=5 // pred_fallthru
      _
    %p249 = scmp.lt.s32.totalorder %s14, 2
    // Predicated region
    $region41: #{devign_head.1} parent=5 // pred_check
      %p250 = pneg %p249
    $region42: #{devign_head.1} parent=5 // pred_check_branch
      %252 = sbr.rel (%p250) target = $region44
    $region43: #{devign_head.1} parent=5 // pred_region
      // Predicated region
      $region45: #{devign_head.1} parent=43 // pred_check
        %p253 = pneg %p34
      $region46: #{devign_head.1} parent=43 // pred_check_branch
        %255 = sbr.rel (%p253) target = $region48
      $region47: #{devign_head.1} parent=43 // pred_region
        %s256 = smul.u32 16, %s14
        %p257 = scmp.lt.s32.totalorder %s256, 31
        %s258 = scalar_select %p257, %s256, 31
        %s259 = smul.addr %s258, 8
        %s260 = scalar_lea.vmem %s0, %s259
        %s261 = smul.u32 16, %s14
      $region48: #{devign_head.1} parent=43 // pred_fallthru
        _
    $region44: #{devign_head.1} parent=5 // pred_fallthru
      _
    %p262 = scmp.le.s32.totalorder 1, %s14
    %p263 = scmp.lt.s32.totalorder %s14, 3
    %p264 = pnand %p262, %p263
    %p265 = pneg %p264
    // Predicated region
    $region49: #{devign_head.1} parent=5 // pred_check
      _
    $region50: #{devign_head.1} parent=5 // pred_check_branch
      %267 = sbr.rel (%p264) target = $region52
    $region51: #{devign_head.1} parent=5 // pred_region
      %s268 = ssub.s32 %s14, 1
      %s269 = smul.u32 16, %s19
      %p270 = scmp.lt.s32.totalorder %s269, 31
      %s271 = scalar_select %p270, %s269, 31
      %s272 = smul.addr %s271, 8
      %s273 = scalar_lea.vmem %s0, %s272
      %p274 = pneg %p40
      %p275 = pneg %p37
      %p276 = pneg %p61
      %p277 = pneg %p58
      %p278 = pneg %p82
      %p279 = pneg %p79
      %p280 = pneg %p103
      %p281 = pneg %p100
      %p282 = pneg %p124
      %p283 = pneg %p121
      %p284 = pneg %p145
      %p285 = pneg %p142
      %p286 = pneg %p166
      %p287 = pneg %p163
      %p288 = pneg %p187
      %p289 = pneg %p184
      %p290 = pneg %p213
      %p291 = pneg %p210
      %p292 = scmp.lt.s32.totalorder %s19, 1
      %s293 = scalar_select %p292, %s19, 1
      %s294 = smul.addr %s293, 8
      %s295 = scalar_lea.vmem %s8, %s294
      %s296 = smul.u32 16, %s19
      %p297 = scmp.lt.s32.totalorder %s296, 31
      %s298 = scalar_select %p297, %s296, 31
      %s299 = smul.addr %s298, 8
      %s300 = scalar_lea.vmem %s0, %s299
      %s301 = smul.u32 16, %s19
      %p302 = scmp.lt.s32.totalorder %s19, 1
      %s303 = scalar_select %p302, %s19, 1
      %s304 = smul.addr %s303, 8
      %s305 = scalar_lea.vmem %s8, %s304
      %v307 = vld [vmem:[%s300] sm:$0xff]
      %v308 = vld [vmem:[%s300 + $0x8] sm:$0xff]
      %v309 = vld [vmem:[%s300 + $0x10] sm:$0xff]
      %v310 = vld [vmem:[%s300 + $0x18] sm:$0xff]
      %v311 = vld [vmem:[%s300 + $0x20] sm:$0xff]
      %v312 = vld [vmem:[%s300 + $0x28] sm:$0xff]
      %v313 = vld [vmem:[%s300 + $0x30] sm:$0xff]
      %v314 = vld [vmem:[%s300 + $0x38] sm:$0xff]
      %v315 = vld [vmem:[%s300 + $0x40] sm:$0xff]
      %v316 = vld [vmem:[%s300 + $0x48] sm:$0xff]
      %v317 = vld [vmem:[%s300 + $0x50] sm:$0xff]
      %v318 = vld [vmem:[%s300 + $0x58] sm:$0xff]
      %v319 = vld [vmem:[%s300 + $0x60] sm:$0xff]
      %v320 = vld [vmem:[%s300 + $0x68] sm:$0xff]
      %v321 = vld [vmem:[%s300 + $0x70] sm:$0xff]
      %v322 = vld [vmem:[%s300 + $0x78] sm:$0x3f]
      %v323 = vpack.c.bf16 %v308, %v307
      %v324 = vpack.c.bf16 %v310, %v309
      %v325 = vpack.c.bf16 %v312, %v311
      %v326 = vpack.c.bf16 %v314, %v313
      %v327 = vpack.c.bf16 %v316, %v315
      %v328 = vpack.c.bf16 %v318, %v317
      %v329 = vpack.c.bf16 %v320, %v319
      %v330 = vpack.c.bf16 %v322, %v321
      %v331 = vld [vmem:[%s1] sm:$0xff]
      %v332 = vld [vmem:[%s1 + $0x8] sm:$0xff]
      %v333 = vld [vmem:[%s1 + $0x10] sm:$0xff]
      %v334 = vld [vmem:[%s1 + $0x18] sm:$0xff]
      %v335 = vld [vmem:[%s1 + $0x20] sm:$0xff]
      %v336 = vld [vmem:[%s1 + $0x28] sm:$0xff]
      %v337 = vld [vmem:[%s1 + $0x30] sm:$0xff]
      %v338 = vld [vmem:[%s1 + $0x38] sm:$0xff]
      %v339 = vld [vmem:[%s1 + $0x40] sm:$0xff]
      %v340 = vld [vmem:[%s1 + $0x48] sm:$0xff]
      %v341 = vld [vmem:[%s1 + $0x50] sm:$0xff]
      %v342 = vld [vmem:[%s1 + $0x58] sm:$0xff]
      %v343 = vld [vmem:[%s1 + $0x60] sm:$0xff]
      %v344 = vld [vmem:[%s1 + $0x68] sm:$0xff]
      %v345 = vld [vmem:[%s1 + $0x70] sm:$0xff]
      %v346 = vld [vmem:[%s1 + $0x78] sm:$0xff]
      %v347 = vld [vmem:[%s300 + $0x1] sm:$0xff]
      %v348 = vld [vmem:[%s300 + $0x9] sm:$0xff]
      %v349 = vld [vmem:[%s300 + $0x11] sm:$0xff]
      %v350 = vld [vmem:[%s300 + $0x19] sm:$0xff]
      %v351 = vld [vmem:[%s300 + $0x21] sm:$0xff]
      %v352 = vld [vmem:[%s300 + $0x29] sm:$0xff]
      %v353 = vld [vmem:[%s300 + $0x31] sm:$0xff]
      %v354 = vld [vmem:[%s300 + $0x39] sm:$0xff]
      %v355 = vld [vmem:[%s300 + $0x41] sm:$0xff]
      %v356 = vld [vmem:[%s300 + $0x49] sm:$0xff]
      %v357 = vld [vmem:[%s300 + $0x51] sm:$0xff]
      %v358 = vld [vmem:[%s300 + $0x59] sm:$0xff]
      %v359 = vld [vmem:[%s300 + $0x61] sm:$0xff]
      %v360 = vld [vmem:[%s300 + $0x69] sm:$0xff]
      %v361 = vld [vmem:[%s300 + $0x71] sm:$0xff]
      %v362 = vld [vmem:[%s300 + $0x79] sm:$0x3f]
      %v363 = vpack.c.bf16 %v348, %v347
      %v364 = vpack.c.bf16 %v350, %v349
      %v365 = vpack.c.bf16 %v352, %v351
      %v366 = vpack.c.bf16 %v354, %v353
      %v367 = vpack.c.bf16 %v356, %v355
      %v368 = vpack.c.bf16 %v358, %v357
      %v369 = vpack.c.bf16 %v360, %v359
      %v370 = vpack.c.bf16 %v362, %v361
      %s371 = scalar_lea.vmem %s1, 128
      %v372 = vld [vmem:[%s371] sm:$0xff]
      %v373 = vld [vmem:[%s371 + $0x8] sm:$0xff]
      %v374 = vld [vmem:[%s371 + $0x10] sm:$0xff]
      %v375 = vld [vmem:[%s371 + $0x18] sm:$0xff]
      %v376 = vld [vmem:[%s371 + $0x20] sm:$0xff]
      %v377 = vld [vmem:[%s371 + $0x28] sm:$0xff]
      %v378 = vld [vmem:[%s371 + $0x30] sm:$0xff]
      %v379 = vld [vmem:[%s371 + $0x38] sm:$0xff]
      %v380 = vld [vmem:[%s371 + $0x40] sm:$0xff]
      %v381 = vld [vmem:[%s371 + $0x48] sm:$0xff]
      %v382 = vld [vmem:[%s371 + $0x50] sm:$0xff]
      %v383 = vld [vmem:[%s371 + $0x58] sm:$0xff]
      %v384 = vld [vmem:[%s371 + $0x60] sm:$0xff]
      %v385 = vld [vmem:[%s371 + $0x68] sm:$0xff]
      %v386 = vld [vmem:[%s371 + $0x70] sm:$0xff]
      %v387 = vld [vmem:[%s371 + $0x78] sm:$0xff]
      %v404 = vunpack.c.l.b16 %v372
      %v405 = vunpack.c.h.b16 %v372
      %v406 = vunpack.c.l.b16 %v373
      %v407 = vunpack.c.h.b16 %v373
      %v408 = vunpack.c.l.b16 %v374
      %v409 = vunpack.c.h.b16 %v374
      %v410 = vunpack.c.l.b16 %v375
      %v411 = vunpack.c.h.b16 %v375
      %v412 = vunpack.c.l.b16 %v376
      %v413 = vunpack.c.h.b16 %v376
      %v414 = vunpack.c.l.b16 %v377
      %v415 = vunpack.c.h.b16 %v377
      %v416 = vunpack.c.l.b16 %v378
      %v417 = vunpack.c.h.b16 %v378
      %v418 = vunpack.c.l.b16 %v379
      %v419 = vunpack.c.h.b16 %v379
      %v420 = vunpack.c.l.b16 %v380
      %v421 = vunpack.c.h.b16 %v380
      %v422 = vunpack.c.l.b16 %v381
      %v423 = vunpack.c.h.b16 %v381
      %v424 = vunpack.c.l.b16 %v382
      %v425 = vunpack.c.h.b16 %v382
      %v426 = vunpack.c.l.b16 %v383
      %v427 = vunpack.c.h.b16 %v383
      %v428 = vunpack.c.l.b16 %v384
      %v429 = vunpack.c.h.b16 %v384
      %v430 = vunpack.c.l.b16 %v385
      %v431 = vunpack.c.h.b16 %v385
      %v432 = vunpack.c.l.b16 %v386
      %v433 = vunpack.c.h.b16 %v386
      %v434 = vunpack.c.l.b16 %v387
      %v435 = vunpack.c.h.b16 %v387
      %v436 = vpack.c.b16 %v406, %v404
      %v437 = vpack.c.b16 %v407, %v405
      %v438 = vpack.c.b16 %v410, %v408
      %v439 = vpack.c.b16 %v411, %v409
      %v440 = vpack.c.b16 %v414, %v412
      %v441 = vpack.c.b16 %v415, %v413
      %v442 = vpack.c.b16 %v418, %v416
      %v443 = vpack.c.b16 %v419, %v417
      %v444 = vpack.c.b16 %v422, %v420
      %v445 = vpack.c.b16 %v423, %v421
      %v446 = vpack.c.b16 %v426, %v424
      %v447 = vpack.c.b16 %v427, %v425
      %v448 = vpack.c.b16 %v430, %v428
      %v449 = vpack.c.b16 %v431, %v429
      %v450 = vpack.c.b16 %v434, %v432
      %v451 = vpack.c.b16 %v435, %v433
      %468 = vmatprep.subr.bf16.mxu0 %v437
      %469 = vmatpush1.bf16.msra.mxu0 %v436
      %470 = vmatprep.subr.bf16.mxu0 %v439
      %471 = vmatpush1.bf16.msra.mxu0 %v438
      %472 = vmatprep.subr.bf16.mxu0 %v441
      %473 = vmatpush1.bf16.msra.mxu0 %v440
      %474 = vmatprep.subr.bf16.mxu0 %v443
      %475 = vmatpush1.bf16.msra.mxu0 %v442
      %476 = vmatprep.subr.bf16.mxu0 %v445
      %477 = vmatpush1.bf16.msra.mxu0 %v444
      %478 = vmatprep.subr.bf16.mxu0 %v447
      %479 = vmatpush1.bf16.msra.mxu0 %v446
      %480 = vmatprep.subr.bf16.mxu0 %v449
      %481 = vmatpush1.bf16.msra.mxu0 %v448
      %482 = vmatprep.subr.bf16.mxu0 %v451
      %483 = vmatpush1.bf16.msra.mxu0 %v450
      %484 = vmatprep.subr.bf16.mxu0 0
      %485 = vmatpush1.bf16.msra.mxu0 0
      %486 = vmatprep.subr.bf16.mxu0 0
      %487 = vmatpush1.bf16.msra.mxu0 0
      %488 = vmatprep.subr.bf16.mxu0 0
      %489 = vmatpush1.bf16.msra.mxu0 0
      %490 = vmatprep.subr.bf16.mxu0 0
      %491 = vmatpush1.bf16.msra.mxu0 0
      %492 = vmatprep.subr.bf16.mxu0 0
      %493 = vmatpush1.bf16.msra.mxu0 0
      %494 = vmatprep.subr.bf16.mxu0 0
      %495 = vmatpush1.bf16.msra.mxu0 0
      %496 = vmatprep.subr.bf16.mxu0 0
      %497 = vmatpush1.bf16.msra.mxu0 0
      %498 = vmatprep.subr.bf16.mxu0 0
      %499 = vmatpush1.bf16.msra.mxu0 0
      %500 = vmatprep.mubr.bf16.mxu0 0
      %501 = vmatmul.mubr.bf16.gmra.mrb[0].mxu0 %v363
      %v502 = vpop.f32.mrb[0].mxu0
      %v503 = vadd.f32 0.0, %v502
      %v504 = vpop.f32.mrb[0].mxu0
      %v505 = vadd.f32 0.0, %v504
      %v506 = vpop.f32.mrb[0].mxu0
      %v507 = vadd.f32 0.0, %v506
      %v508 = vpop.f32.mrb[0].mxu0
      %v509 = vadd.f32 0.0, %v508
      %510 = vmatprep.mubr.bf16.mxu0 0
      %511 = vmatmul.mubr.bf16.gmra.mrb[0].mxu0 %v364
      %v512 = vpop.f32.mrb[0].mxu0
      %v513 = vadd.f32 0.0, %v512
      %v514 = vpop.f32.mrb[0].mxu0
      %v515 = vadd.f32 0.0, %v514
      %v516 = vpop.f32.mrb[0].mxu0
      %v517 = vadd.f32 0.0, %v516
      %v518 = vpop.f32.mrb[0].mxu0
      %v519 = vadd.f32 0.0, %v518
      %520 = vmatprep.mubr.bf16.mxu0 0
      %521 = vmatmul.mubr.bf16.gmra.mrb[0].mxu0 %v365
      %v522 = vpop.f32.mrb[0].mxu0
      %v523 = vadd.f32 0.0, %v522
      %v524 = vpop.f32.mrb[0].mxu0
      %v525 = vadd.f32 0.0, %v524
      %v526 = vpop.f32.mrb[0].mxu0
      %v527 = vadd.f32 0.0, %v526
      %v528 = vpop.f32.mrb[0].mxu0
      %v529 = vadd.f32 0.0, %v528
      %530 = vmatprep.mubr.bf16.mxu0 0
      %531 = vmatmul.mubr.bf16.gmra.mrb[0].mxu0 %v366
      %v532 = vpop.f32.mrb[0].mxu0
      %v533 = vadd.f32 0.0, %v532
      %v534 = vpop.f32.mrb[0].mxu0
      %v535 = vadd.f32 0.0, %v534
      %v536 = vpop.f32.mrb[0].mxu0
      %v537 = vadd.f32 0.0, %v536
      %v538 = vpop.f32.mrb[0].mxu0
      %v539 = vadd.f32 0.0, %v538
      %540 = vmatprep.mubr.bf16.mxu0 0
      %541 = vmatmul.mubr.bf16.gmra.mrb[0].mxu0 %v367
      %v542 = vpop.f32.mrb[0].mxu0
      %v543 = vadd.f32 0.0, %v542
      %v544 = vpop.f32.mrb[0].mxu0
      %v545 = vadd.f32 0.0, %v544
      %v546 = vpop.f32.mrb[0].mxu0
      %v547 = vadd.f32 0.0, %v546
      %v548 = vpop.f32.mrb[0].mxu0
      %v549 = vadd.f32 0.0, %v548
      %550 = vmatprep.mubr.bf16.mxu0 0
      %551 = vmatmul.mubr.bf16.gmra.mrb[0].mxu0 %v368
      %v552 = vpop.f32.mrb[0].mxu0
      %v553 = vadd.f32 0.0, %v552
      %v554 = vpop.f32.mrb[0].mxu0
      %v555 = vadd.f32 0.0, %v554
      %v556 = vpop.f32.mrb[0].mxu0
      %v557 = vadd.f32 0.0, %v556
      %v558 = vpop.f32.mrb[0].mxu0
      %v559 = vadd.f32 0.0, %v558
      %560 = vmatprep.mubr.bf16.mxu0 0
      %561 = vmatmul.mubr.bf16.gmra.mrb[0].mxu0 %v369
      %v562 = vpop.f32.mrb[0].mxu0
      %v563 = vadd.f32 0.0, %v562
      %v564 = vpop.f32.mrb[0].mxu0
      %v565 = vadd.f32 0.0, %v564
      %v566 = vpop.f32.mrb[0].mxu0
      %v567 = vadd.f32 0.0, %v566
      %v568 = vpop.f32.mrb[0].mxu0
      %v569 = vadd.f32 0.0, %v568
      %570 = vmatprep.mubr.bf16.mxu0 0
      %571 = vmatmul.mubr.bf16.gmra.mrb[0].mxu0 %v370
      %v572 = vpop.f32.mrb[0].mxu0
      %v573 = vadd.f32 0.0, %v572
      %v574 = vpop.f32.mrb[0].mxu0
      %v575 = vadd.f32 0.0, %v574
      %v576 = vpop.f32.mrb[0].mxu0
      %v577 = vadd.f32 0.0, %v576
      %v578 = vpop.f32.mrb[0].mxu0
      %v579 = vadd.f32 0.0, %v578
      %580 = vdwg.mxu0
      %v597 = vunpack.c.l.b16 %v331
      %v598 = vunpack.c.h.b16 %v331
      %v599 = vunpack.c.l.b16 %v332
      %v600 = vunpack.c.h.b16 %v332
      %v601 = vunpack.c.l.b16 %v333
      %v602 = vunpack.c.h.b16 %v333
      %v603 = vunpack.c.l.b16 %v334
      %v604 = vunpack.c.h.b16 %v334
      %v605 = vunpack.c.l.b16 %v335
      %v606 = vunpack.c.h.b16 %v335
      %v607 = vunpack.c.l.b16 %v336
      %v608 = vunpack.c.h.b16 %v336
      %v609 = vunpack.c.l.b16 %v337
      %v610 = vunpack.c.h.b16 %v337
      %v611 = vunpack.c.l.b16 %v338
      %v612 = vunpack.c.h.b16 %v338
      %v613 = vunpack.c.l.b16 %v339
      %v614 = vunpack.c.h.b16 %v339
      %v615 = vunpack.c.l.b16 %v340
      %v616 = vunpack.c.h.b16 %v340
      %v617 = vunpack.c.l.b16 %v341
      %v618 = vunpack.c.h.b16 %v341
      %v619 = vunpack.c.l.b16 %v342
      %v620 = vunpack.c.h.b16 %v342
      %v621 = vunpack.c.l.b16 %v343
      %v622 = vunpack.c.h.b16 %v343
      %v623 = vunpack.c.l.b16 %v344
      %v624 = vunpack.c.h.b16 %v344
      %v625 = vunpack.c.l.b16 %v345
      %v626 = vunpack.c.h.b16 %v345
      %v627 = vunpack.c.l.b16 %v346
      %v628 = vunpack.c.h.b16 %v346
      %v629 = vpack.c.b16 %v599, %v597
      %v630 = vpack.c.b16 %v600, %v598
      %v631 = vpack.c.b16 %v603, %v601
      %v632 = vpack.c.b16 %v604, %v602
      %v633 = vpack.c.b16 %v607, %v605
      %v634 = vpack.c.b16 %v608, %v606
      %v635 = vpack.c.b16 %v611, %v609
      %v636 = vpack.c.b16 %v612, %v610
      %v637 = vpack.c.b16 %v615, %v613
      %v638 = vpack.c.b16 %v616, %v614
      %v639 = vpack.c.b16 %v619, %v617
      %v640 = vpack.c.b16 %v620, %v618
      %v641 = vpack.c.b16 %v623, %v621
      %v642 = vpack.c.b16 %v624, %v622
      %v643 = vpack.c.b16 %v627, %v625
      %v644 = vpack.c.b16 %v628, %v626
      %661 = vmatprep.subr.bf16.mxu0 %v630
      %662 = vmatpush1.bf16.msra.mxu0 %v629
      %663 = vmatprep.subr.bf16.mxu0 %v632
      %664 = vmatpush1.bf16.msra.mxu0 %v631
      %665 = vmatprep.subr.bf16.mxu0 %v634
      %666 = vmatpush1.bf16.msra.mxu0 %v633
      %667 = vmatprep.subr.bf16.mxu0 %v636
      %668 = vmatpush1.bf16.msra.mxu0 %v635
      %669 = vmatprep.subr.bf16.mxu0 %v638
      %670 = vmatpush1.bf16.msra.mxu0 %v637
      %671 = vmatprep.subr.bf16.mxu0 %v640
      %672 = vmatpush1.bf16.msra.mxu0 %v639
      %673 = vmatprep.subr.bf16.mxu0 %v642
      %674 = vmatpush1.bf16.msra.mxu0 %v641
      %675 = vmatprep.subr.bf16.mxu0 %v644
      %676 = vmatpush1.bf16.msra.mxu0 %v643
      %677 = vmatprep.subr.bf16.mxu0 0
      %678 = vmatpush1.bf16.msra.mxu0 0
      %679 = vmatprep.subr.bf16.mxu0 0
      %680 = vmatpush1.bf16.msra.mxu0 0
      %681 = vmatprep.subr.bf16.mxu0 0
      %682 = vmatpush1.bf16.msra.mxu0 0
      %683 = vmatprep.subr.bf16.mxu0 0
      %684 = vmatpush1.bf16.msra.mxu0 0
      %685 = vmatprep.subr.bf16.mxu0 0
      %686 = vmatpush1.bf16.msra.mxu0 0
      %687 = vmatprep.subr.bf16.mxu0 0
      %688 = vmatpush1.bf16.msra.mxu0 0
      %689 = vmatprep.subr.bf16.mxu0 0
      %690 = vmatpush1.bf16.msra.mxu0 0
      %691 = vmatprep.subr.bf16.mxu0 0
      %692 = vmatpush1.bf16.msra.mxu0 0
      %693 = vmatprep.mubr.bf16.mxu0 0
      %694 = vmatmul.mubr.bf16.gmra.mrb[0].mxu0 %v323
      %v695 = vpop.f32.mrb[0].mxu0
      %v696 = vadd.f32 %v503, %v695
      %v697 = vpop.f32.mrb[0].mxu0
      %v698 = vadd.f32 %v505, %v697
      %v699 = vpop.f32.mrb[0].mxu0
      %v700 = vadd.f32 %v507, %v699
      %v701 = vpop.f32.mrb[0].mxu0
      %v702 = vadd.f32 %v509, %v701
      %703 = vmatprep.mubr.bf16.mxu0 0
      %704 = vmatmul.mubr.bf16.gmra.mrb[0].mxu0 %v324
      %v705 = vpop.f32.mrb[0].mxu0
      %v706 = vadd.f32 %v513, %v705
      %v707 = vpop.f32.mrb[0].mxu0
      %v708 = vadd.f32 %v515, %v707
      %v709 = vpop.f32.mrb[0].mxu0
      %v710 = vadd.f32 %v517, %v709
      %v711 = vpop.f32.mrb[0].mxu0
      %v712 = vadd.f32 %v519, %v711
      %713 = vmatprep.mubr.bf16.mxu0 0
      %714 = vmatmul.mubr.bf16.gmra.mrb[0].mxu0 %v325
      %v715 = vpop.f32.mrb[0].mxu0
      %v716 = vadd.f32 %v523, %v715
      %v717 = vpop.f32.mrb[0].mxu0
      %v718 = vadd.f32 %v525, %v717
      %v719 = vpop.f32.mrb[0].mxu0
      %v720 = vadd.f32 %v527, %v719
      %v721 = vpop.f32.mrb[0].mxu0
      %v722 = vadd.f32 %v529, %v721
      %723 = vmatprep.mubr.bf16.mxu0 0
      %724 = vmatmul.mubr.bf16.gmra.mrb[0].mxu0 %v326
      %v725 = vpop.f32.mrb[0].mxu0
      %v726 = vadd.f32 %v533, %v725
      %v727 = vpop.f32.mrb[0].mxu0
      %v728 = vadd.f32 %v535, %v727
      %v729 = vpop.f32.mrb[0].mxu0
      %v730 = vadd.f32 %v537, %v729
      %v731 = vpop.f32.mrb[0].mxu0
      %v732 = vadd.f32 %v539, %v731
      %733 = vmatprep.mubr.bf16.mxu0 0
      %734 = vmatmul.mubr.bf16.gmra.mrb[0].mxu0 %v327
      %v735 = vpop.f32.mrb[0].mxu0
      %v736 = vadd.f32 %v543, %v735
      %v737 = vpop.f32.mrb[0].mxu0
      %v738 = vadd.f32 %v545, %v737
      %v739 = vpop.f32.mrb[0].mxu0
      %v740 = vadd.f32 %v547, %v739
      %v741 = vpop.f32.mrb[0].mxu0
      %v742 = vadd.f32 %v549, %v741
      %743 = vmatprep.mubr.bf16.mxu0 0
      %744 = vmatmul.mubr.bf16.gmra.mrb[0].mxu0 %v328
      %v745 = vpop.f32.mrb[0].mxu0
      %v746 = vadd.f32 %v553, %v745
      %v747 = vpop.f32.mrb[0].mxu0
      %v748 = vadd.f32 %v555, %v747
      %v749 = vpop.f32.mrb[0].mxu0
      %v750 = vadd.f32 %v557, %v749
      %v751 = vpop.f32.mrb[0].mxu0
      %v752 = vadd.f32 %v559, %v751
      %753 = vmatprep.mubr.bf16.mxu0 0
      %754 = vmatmul.mubr.bf16.gmra.mrb[0].mxu0 %v329
      %v755 = vpop.f32.mrb[0].mxu0
      %v756 = vadd.f32 %v563, %v755
      %v757 = vpop.f32.mrb[0].mxu0
      %v758 = vadd.f32 %v565, %v757
      %v759 = vpop.f32.mrb[0].mxu0
      %v760 = vadd.f32 %v567, %v759
      %v761 = vpop.f32.mrb[0].mxu0
      %v762 = vadd.f32 %v569, %v761
      %763 = vmatprep.mubr.bf16.mxu0 0
      %764 = vmatmul.mubr.bf16.gmra.mrb[0].mxu0 %v330
      %v765 = vpop.f32.mrb[0].mxu0
      %v766 = vadd.f32 %v573, %v765
      %v767 = vpop.f32.mrb[0].mxu0
      %v768 = vadd.f32 %v575, %v767
      %v769 = vpop.f32.mrb[0].mxu0
      %v770 = vadd.f32 %v577, %v769
      %v771 = vpop.f32.mrb[0].mxu0
      %v772 = vadd.f32 %v579, %v771
      %773 = vdwg.mxu0
      %v774 = vld [vmem:[%s300 + $0x2] sm:$0xff]
      %v775 = vld [vmem:[%s300 + $0xa] sm:$0xff]
      %v776 = vld [vmem:[%s300 + $0x12] sm:$0xff]
      %v777 = vld [vmem:[%s300 + $0x1a] sm:$0xff]
      %v778 = vld [vmem:[%s300 + $0x22] sm:$0xff]
      %v779 = vld [vmem:[%s300 + $0x2a] sm:$0xff]
      %v780 = vld [vmem:[%s300 + $0x32] sm:$0xff]
      %v781 = vld [vmem:[%s300 + $0x3a] sm:$0xff]
      %v782 = vld [vmem:[%s300 + $0x42] sm:$0xff]
      %v783 = vld [vmem:[%s300 + $0x4a] sm:$0xff]
      %v784 = vld [vmem:[%s300 + $0x52] sm:$0xff]
      %v785 = vld [vmem:[%s300 + $0x5a] sm:$0xff]
      %v786 = vld [vmem:[%s300 + $0x62] sm:$0xff]
      %v787 = vld [vmem:[%s300 + $0x6a] sm:$0xff]
      %v788 = vld [vmem:[%s300 + $0x72] sm:$0xff]
      %v789 = vld [vmem:[%s300 + $0x7a] sm:$0x3f]
      %v790 = vpack.c.bf16 %v775, %v774
      %v791 = vpack.c.bf16 %v777, %v776
      %v792 = vpack.c.bf16 %v779, %v778
      %v793 = vpack.c.bf16 %v781, %v780
      %v794 = vpack.c.bf16 %v783, %v782
      %v795 = vpack.c.bf16 %v785, %v784
      %v796 = vpack.c.bf16 %v787, %v786
      %v797 = vpack.c.bf16 %v789, %v788
      %s798 = scalar_lea.vmem %s1, 256
      %v799 = vld [vmem:[%s798] sm:$0xff]
      %v800 = vld [vmem:[%s798 + $0x8] sm:$0xff]
      %v801 = vld [vmem:[%s798 + $0x10] sm:$0xff]
      %v802 = vld [vmem:[%s798 + $0x18] sm:$0xff]
      %v803 = vld [vmem:[%s798 + $0x20] sm:$0xff]
      %v804 = vld [vmem:[%s798 + $0x28] sm:$0xff]
      %v805 = vld [vmem:[%s798 + $0x30] sm:$0xff]
      %v806 = vld [vmem:[%s798 + $0x38] sm:$0xff]
      %v807 = vld [vmem:[%s798 + $0x40] sm:$0xff]
      %v808 = vld [vmem:[%s798 + $0x48] sm:$0xff]
      %v809 = vld [vmem:[%s798 + $0x50] sm:$0xff]
      %v810 = vld [vmem:[%s798 + $0x58] sm:$0xff]
      %v811 = vld [vmem:[%s798 + $0x60] sm:$0xff]
      %v812 = vld [vmem:[%s798 + $0x68] sm:$0xff]
      %v813 = vld [vmem:[%s798 + $0x70] sm:$0xff]
      %v814 = vld [vmem:[%s798 + $0x78] sm:$0xff]
      %v831 = vunpack.c.l.b16 %v799
      %v832 = vunpack.c.h.b16 %v799
      %v833 = vunpack.c.l.b16 %v800
      %v834 = vunpack.c.h.b16 %v800
      %v835 = vunpack.c.l.b16 %v801
      %v836 = vunpack.c.h.b16 %v801
      %v837 = vunpack.c.l.b16 %v802
      %v838 = vunpack.c.h.b16 %v802
      %v839 = vunpack.c.l.b16 %v803
      %v840 = vunpack.c.h.b16 %v803
      %v841 = vunpack.c.l.b16 %v804
      %v842 = vunpack.c.h.b16 %v804
      %v843 = vunpack.c.l.b16 %v805
      %v844 = vunpack.c.h.b16 %v805
      %v845 = vunpack.c.l.b16 %v806
      %v846 = vunpack.c.h.b16 %v806
      %v847 = vunpack.c.l.b16 %v807
      %v848 = vunpack.c.h.b16 %v807
      %v849 = vunpack.c.l.b16 %v808
      %v850 = vunpack.c.h.b16 %v808
      %v851 = vunpack.c.l.b16 %v809
      %v852 = vunpack.c.h.b16 %v809
      %v853 = vunpack.c.l.b16 %v810
      %v854 = vunpack.c.h.b16 %v810
      %v855 = vunpack.c.l.b16 %v811
      %v856 = vunpack.c.h.b16 %v811
      %v857 = vunpack.c.l.b16 %v812
      %v858 = vunpack.c.h.b16 %v812
      %v859 = vunpack.c.l.b16 %v813
      %v860 = vunpack.c.h.b16 %v813
      %v861 = vunpack.c.l.b16 %v814
      %v862 = vunpack.c.h.b16 %v814
      %v863 = vpack.c.b16 %v833, %v831
      %v864 = vpack.c.b16 %v834, %v832
      %v865 = vpack.c.b16 %v837, %v835
      %v866 = vpack.c.b16 %v838, %v836
      %v867 = vpack.c.b16 %v841, %v839
      %v868 = vpack.c.b16 %v842, %v840
      %v869 = vpack.c.b16 %v845, %v843
      %v870 = vpack.c.b16 %v846, %v844
      %v871 = vpack.c.b16 %v849, %v847
      %v872 = vpack.c.b16 %v850, %v848
      %v873 = vpack.c.b16 %v853, %v851
      %v874 = vpack.c.b16 %v854, %v852
      %v875 = vpack.c.b16 %v857, %v855
      %v876 = vpack.c.b16 %v858, %v856
      %v877 = vpack.c.b16 %v861, %v859
      %v878 = vpack.c.b16 %v862, %v860
      %895 = vmatprep.subr.bf16.mxu0 %v864
      %896 = vmatpush1.bf16.msra.mxu0 %v863
      %897 = vmatprep.subr.bf16.mxu0 %v866
      %898 = vmatpush1.bf16.msra.mxu0 %v865
      %899 = vmatprep.subr.bf16.mxu0 %v868
      %900 = vmatpush1.bf16.msra.mxu0 %v867
      %901 = vmatprep.subr.bf16.mxu0 %v870
      %902 = vmatpush1.bf16.msra.mxu0 %v869
      %903 = vmatprep.subr.bf16.mxu0 %v872
      %904 = vmatpush1.bf16.msra.mxu0 %v871
      %905 = vmatprep.subr.bf16.mxu0 %v874
      %906 = vmatpush1.bf16.msra.mxu0 %v873
      %907 = vmatprep.subr.bf16.mxu0 %v876
      %908 = vmatpush1.bf16.msra.mxu0 %v875
      %909 = vmatprep.subr.bf16.mxu0 %v878
      %910 = vmatpush1.bf16.msra.mxu0 %v877
      %911 = vmatprep.subr.bf16.mxu0 0
      %912 = vmatpush1.bf16.msra.mxu0 0
      %913 = vmatprep.subr.bf16.mxu0 0
      %914 = vmatpush1.bf16.msra.mxu0 0
      %915 = vmatprep.subr.bf16.mxu0 0
      %916 = vmatpush1.bf16.msra.mxu0 0
      %917 = vmatprep.subr.bf16.mxu0 0
      %918 = vmatpush1.bf16.msra.mxu0 0
      %919 = vmatprep.subr.bf16.mxu0 0
      %920 = vmatpush1.bf16.msra.mxu0 0
      %921 = vmatprep.subr.bf16.mxu0 0
      %922 = vmatpush1.bf16.msra.mxu0 0
      %923 = vmatprep.subr.bf16.mxu0 0
      %924 = vmatpush1.bf16.msra.mxu0 0
      %925 = vmatprep.subr.bf16.mxu0 0
      %926 = vmatpush1.bf16.msra.mxu0 0
      %927 = vmatprep.mubr.bf16.mxu0 0
      %928 = vmatmul.mubr.bf16.gmra.mrb[0].mxu0 %v790
      %v929 = vpop.f32.mrb[0].mxu0
      %v930 = vadd.f32 0.0, %v929
      %v931 = vpop.f32.mrb[0].mxu0
      %v932 = vadd.f32 0.0, %v931
      %v933 = vpop.f32.mrb[0].mxu0
      %v934 = vadd.f32 0.0, %v933
      %v935 = vpop.f32.mrb[0].mxu0
      %v936 = vadd.f32 0.0, %v935
      %937 = vmatprep.mubr.bf16.mxu0 0
      %938 = vmatmul.mubr.bf16.gmra.mrb[0].mxu0 %v791
      %v939 = vpop.f32.mrb[0].mxu0
      %v940 = vadd.f32 0.0, %v939
      %v941 = vpop.f32.mrb[0].mxu0
      %v942 = vadd.f32 0.0, %v941
      %v943 = vpop.f32.mrb[0].mxu0
      %v944 = vadd.f32 0.0, %v943
      %v945 = vpop.f32.mrb[0].mxu0
      %v946 = vadd.f32 0.0, %v945
      %947 = vmatprep.mubr.bf16.mxu0 0
      %948 = vmatmul.mubr.bf16.gmra.mrb[0].mxu0 %v792
      %v949 = vpop.f32.mrb[0].mxu0
      %v950 = vadd.f32 0.0, %v949
      %v951 = vpop.f32.mrb[0].mxu0
      %v952 = vadd.f32 0.0, %v951
      %v953 = vpop.f32.mrb[0].mxu0
      %v954 = vadd.f32 0.0, %v953
      %v955 = vpop.f32.mrb[0].mxu0
      %v956 = vadd.f32 0.0, %v955
      %957 = vmatprep.mubr.bf16.mxu0 0
      %958 = vmatmul.mubr.bf16.gmra.mrb[0].mxu0 %v793
      %v959 = vpop.f32.mrb[0].mxu0
      %v960 = vadd.f32 0.0, %v959
      %v961 = vpop.f32.mrb[0].mxu0
      %v962 = vadd.f32 0.0, %v961
      %v963 = vpop.f32.mrb[0].mxu0
      %v964 = vadd.f32 0.0, %v963
      %v965 = vpop.f32.mrb[0].mxu0
      %v966 = vadd.f32 0.0, %v965
      %967 = vmatprep.mubr.bf16.mxu0 0
      %968 = vmatmul.mubr.bf16.gmra.mrb[0].mxu0 %v794
      %v969 = vpop.f32.mrb[0].mxu0
      %v970 = vadd.f32 0.0, %v969
      %v971 = vpop.f32.mrb[0].mxu0
      %v972 = vadd.f32 0.0, %v971
      %v973 = vpop.f32.mrb[0].mxu0
      %v974 = vadd.f32 0.0, %v973
      %v975 = vpop.f32.mrb[0].mxu0
      %v976 = vadd.f32 0.0, %v975
      %977 = vmatprep.mubr.bf16.mxu0 0
      %978 = vmatmul.mubr.bf16.gmra.mrb[0].mxu0 %v795
      %v979 = vpop.f32.mrb[0].mxu0
      %v980 = vadd.f32 0.0, %v979
      %v981 = vpop.f32.mrb[0].mxu0
      %v982 = vadd.f32 0.0, %v981
      %v983 = vpop.f32.mrb[0].mxu0
      %v984 = vadd.f32 0.0, %v983
      %v985 = vpop.f32.mrb[0].mxu0
      %v986 = vadd.f32 0.0, %v985
      %987 = vmatprep.mubr.bf16.mxu0 0
      %988 = vmatmul.mubr.bf16.gmra.mrb[0].mxu0 %v796
      %v989 = vpop.f32.mrb[0].mxu0
      %v990 = vadd.f32 0.0, %v989
      %v991 = vpop.f32.mrb[0].mxu0
      %v992 = vadd.f32 0.0, %v991
      %v993 = vpop.f32.mrb[0].mxu0
      %v994 = vadd.f32 0.0, %v993
      %v995 = vpop.f32.mrb[0].mxu0
      %v996 = vadd.f32 0.0, %v995
      %997 = vmatprep.mubr.bf16.mxu0 0
      %998 = vmatmul.mubr.bf16.gmra.mrb[0].mxu0 %v797
      %v999 = vpop.f32.mrb[0].mxu0
      %v1000 = vadd.f32 0.0, %v999
      %v1001 = vpop.f32.mrb[0].mxu0
      %v1002 = vadd.f32 0.0, %v1001
      %v1003 = vpop.f32.mrb[0].mxu0
      %v1004 = vadd.f32 0.0, %v1003
      %v1005 = vpop.f32.mrb[0].mxu0
      %v1006 = vadd.f32 0.0, %v1005
      %1007 = vdwg.mxu0
      %v1008 = vadd.f32 %v696, %v930
      %v1009 = vadd.f32 %v698, %v932
      %v1010 = vadd.f32 %v700, %v934
      %v1011 = vadd.f32 %v702, %v936
      %v1012 = vadd.f32 %v706, %v940
      %v1013 = vadd.f32 %v708, %v942
      %v1014 = vadd.f32 %v710, %v944
      %v1015 = vadd.f32 %v712, %v946
      %v1016 = vadd.f32 %v716, %v950
      %v1017 = vadd.f32 %v718, %v952
      %v1018 = vadd.f32 %v720, %v954
      %v1019 = vadd.f32 %v722, %v956
      %v1020 = vadd.f32 %v726, %v960
      %v1021 = vadd.f32 %v728, %v962
      %v1022 = vadd.f32 %v730, %v964
      %v1023 = vadd.f32 %v732, %v966
      %v1024 = vadd.f32 %v736, %v970
      %v1025 = vadd.f32 %v738, %v972
      %v1026 = vadd.f32 %v740, %v974
      %v1027 = vadd.f32 %v742, %v976
      %v1028 = vadd.f32 %v746, %v980
      %v1029 = vadd.f32 %v748, %v982
      %v1030 = vadd.f32 %v750, %v984
      %v1031 = vadd.f32 %v752, %v986
      %v1032 = vadd.f32 %v756, %v990
      %v1033 = vadd.f32 %v758, %v992
      %v1034 = vadd.f32 %v760, %v994
      %v1035 = vadd.f32 %v762, %v996
      %v1036 = vadd.f32 %v766, %v1000
      %v1037 = vadd.f32 %v768, %v1002
      %v1038 = vadd.f32 %v770, %v1004
      %v1039 = vadd.f32 %v772, %v1006
      %v1040 = vld [vmem:[%s2] sm:$0x3]
      %v1042 = vlaneseq
      %v1043 = vshrl.u32 %v1042, 7
      %v1044 = vsub.s32 0, %v1043
      %v1045 = vrot.slane %v1040, %v1044
      %v1046 = vlaneseq
      %v1047 = vshrl.u32 %v1046, 7
      %v1048 = vsub.s32 1, %v1047
      %v1049 = vrot.slane %v1040, %v1048
      %v1052 = vadd.f32 %v1008, %v1045
      %v1053 = vadd.f32 %v1009, %v1049
      %v1054 = vadd.f32 %v1010, %v1045
      %v1055 = vadd.f32 %v1011, %v1049
      %v1056 = vadd.f32 %v1012, %v1045
      %v1057 = vadd.f32 %v1013, %v1049
      %v1058 = vadd.f32 %v1014, %v1045
      %v1059 = vadd.f32 %v1015, %v1049
      %v1060 = vadd.f32 %v1016, %v1045
      %v1061 = vadd.f32 %v1017, %v1049
      %v1062 = vadd.f32 %v1018, %v1045
      %v1063 = vadd.f32 %v1019, %v1049
      %v1064 = vadd.f32 %v1020, %v1045
      %v1065 = vadd.f32 %v1021, %v1049
      %v1066 = vadd.f32 %v1022, %v1045
      %v1067 = vadd.f32 %v1023, %v1049
      %v1068 = vadd.f32 %v1024, %v1045
      %v1069 = vadd.f32 %v1025, %v1049
      %v1070 = vadd.f32 %v1026, %v1045
      %v1071 = vadd.f32 %v1027, %v1049
      %v1072 = vadd.f32 %v1028, %v1045
      %v1073 = vadd.f32 %v1029, %v1049
      %v1074 = vadd.f32 %v1030, %v1045
      %v1075 = vadd.f32 %v1031, %v1049
      %v1076 = vadd.f32 %v1032, %v1045
      %v1077 = vadd.f32 %v1033, %v1049
      %v1078 = vadd.f32 %v1034, %v1045
      %v1079 = vadd.f32 %v1035, %v1049
      %v1080 = vadd.f32 %v1036, %v1045
      %v1081 = vadd.f32 %v1037, %v1049
      %v1082 = vadd.f32 %v1038, %v1045
      %v1083 = vadd.f32 %v1039, %v1049
      %v1084 = vmax.f32 %v1052, 0.0
      %v1085 = vmax.f32 %v1053, 0.0
      %v1086 = vmax.f32 %v1054, 0.0
      %v1087 = vmax.f32 %v1055, 0.0
      %v1088 = vmax.f32 %v1056, 0.0
      %v1089 = vmax.f32 %v1057, 0.0
      %v1090 = vmax.f32 %v1058, 0.0
      %v1091 = vmax.f32 %v1059, 0.0
      %v1092 = vmax.f32 %v1060, 0.0
      %v1093 = vmax.f32 %v1061, 0.0
      %v1094 = vmax.f32 %v1062, 0.0
      %v1095 = vmax.f32 %v1063, 0.0
      %v1096 = vmax.f32 %v1064, 0.0
      %v1097 = vmax.f32 %v1065, 0.0
      %v1098 = vmax.f32 %v1066, 0.0
      %v1099 = vmax.f32 %v1067, 0.0
      %v1100 = vmax.f32 %v1068, 0.0
      %v1101 = vmax.f32 %v1069, 0.0
      %v1102 = vmax.f32 %v1070, 0.0
      %v1103 = vmax.f32 %v1071, 0.0
      %v1104 = vmax.f32 %v1072, 0.0
      %v1105 = vmax.f32 %v1073, 0.0
      %v1106 = vmax.f32 %v1074, 0.0
      %v1107 = vmax.f32 %v1075, 0.0
      %v1108 = vmax.f32 %v1076, 0.0
      %v1109 = vmax.f32 %v1077, 0.0
      %v1110 = vmax.f32 %v1078, 0.0
      %v1111 = vmax.f32 %v1079, 0.0
      %v1112 = vmax.f32 %v1080, 0.0
      %v1113 = vmax.f32 %v1081, 0.0
      %v1114 = vmax.f32 %v1082, 0.0
      %v1115 = vmax.f32 %v1083, 0.0
      %vm1148 = vcmask 1046528
      %v1149 = vrot.slane %v1084, 1
      %v1150 = vrot.slane %v1086, 1
      %v1151 = vsel %vm1148, %v1149, %v1150
      %v1152 = vrot.slane %v1085, 1
      %v1153 = vrot.slane %v1087, 1
      %v1154 = vsel %vm1148, %v1152, %v1153
      %v1155 = vrot.slane %v1088, 1
      %v1156 = vsel %vm1148, %v1150, %v1155
      %v1157 = vrot.slane %v1089, 1
      %v1158 = vsel %vm1148, %v1153, %v1157
      %v1159 = vrot.slane %v1090, 1
      %v1160 = vsel %vm1148, %v1155, %v1159
      %v1161 = vrot.slane %v1091, 1
      %v1162 = vsel %vm1148, %v1157, %v1161
      %v1163 = vrot.slane %v1092, 1
      %v1164 = vsel %vm1148, %v1159, %v1163
      %v1165 = vrot.slane %v1093, 1
      %v1166 = vsel %vm1148, %v1161, %v1165
      %v1167 = vrot.slane %v1094, 1
      %v1168 = vsel %vm1148, %v1163, %v1167
      %v1169 = vrot.slane %v1095, 1
      %v1170 = vsel %vm1148, %v1165, %v1169
      %v1171 = vrot.slane %v1096, 1
      %v1172 = vsel %vm1148, %v1167, %v1171
      %v1173 = vrot.slane %v1097, 1
      %v1174 = vsel %vm1148, %v1169, %v1173
      %v1175 = vrot.slane %v1098, 1
      %v1176 = vsel %vm1148, %v1171, %v1175
      %v1177 = vrot.slane %v1099, 1
      %v1178 = vsel %vm1148, %v1173, %v1177
      %v1179 = vrot.slane %v1100, 1
      %v1180 = vsel %vm1148, %v1175, %v1179
      %v1181 = vrot.slane %v1101, 1
      %v1182 = vsel %vm1148, %v1177, %v1181
      %v1183 = vrot.slane %v1102, 1
      %v1184 = vsel %vm1148, %v1179, %v1183
      %v1185 = vrot.slane %v1103, 1
      %v1186 = vsel %vm1148, %v1181, %v1185
      %v1187 = vrot.slane %v1104, 1
      %v1188 = vsel %vm1148, %v1183, %v1187
      %v1189 = vrot.slane %v1105, 1
      %v1190 = vsel %vm1148, %v1185, %v1189
      %v1191 = vrot.slane %v1106, 1
      %v1192 = vsel %vm1148, %v1187, %v1191
      %v1193 = vrot.slane %v1107, 1
      %v1194 = vsel %vm1148, %v1189, %v1193
      %v1195 = vrot.slane %v1108, 1
      %v1196 = vsel %vm1148, %v1191, %v1195
      %v1197 = vrot.slane %v1109, 1
      %v1198 = vsel %vm1148, %v1193, %v1197
      %v1199 = vrot.slane %v1110, 1
      %v1200 = vsel %vm1148, %v1195, %v1199
      %v1201 = vrot.slane %v1111, 1
      %v1202 = vsel %vm1148, %v1197, %v1201
      %v1203 = vrot.slane %v1112, 1
      %v1204 = vsel %vm1148, %v1199, %v1203
      %v1205 = vrot.slane %v1113, 1
      %v1206 = vsel %vm1148, %v1201, %v1205
      %v1207 = vrot.slane %v1114, 1
      %v1208 = vsel %vm1148, %v1203, %v1207
      %v1209 = vrot.slane %v1115, 1
      %v1210 = vsel %vm1148, %v1205, %v1209
      %v1243 = vmax.f32 %v1084, %v1151
      %v1244 = vmax.f32 %v1085, %v1154
      %v1245 = vmax.f32 %v1086, %v1156
      %v1246 = vmax.f32 %v1087, %v1158
      %v1247 = vmax.f32 %v1088, %v1160
      %v1248 = vmax.f32 %v1089, %v1162
      %v1249 = vmax.f32 %v1090, %v1164
      %v1250 = vmax.f32 %v1091, %v1166
      %v1251 = vmax.f32 %v1092, %v1168
      %v1252 = vmax.f32 %v1093, %v1170
      %v1253 = vmax.f32 %v1094, %v1172
      %v1254 = vmax.f32 %v1095, %v1174
      %v1255 = vmax.f32 %v1096, %v1176
      %v1256 = vmax.f32 %v1097, %v1178
      %v1257 = vmax.f32 %v1098, %v1180
      %v1258 = vmax.f32 %v1099, %v1182
      %v1259 = vmax.f32 %v1100, %v1184
      %v1260 = vmax.f32 %v1101, %v1186
      %v1261 = vmax.f32 %v1102, %v1188
      %v1262 = vmax.f32 %v1103, %v1190
      %v1263 = vmax.f32 %v1104, %v1192
      %v1264 = vmax.f32 %v1105, %v1194
      %v1265 = vmax.f32 %v1106, %v1196
      %v1266 = vmax.f32 %v1107, %v1198
      %v1267 = vmax.f32 %v1108, %v1200
      %v1268 = vmax.f32 %v1109, %v1202
      %v1269 = vmax.f32 %v1110, %v1204
      %v1270 = vmax.f32 %v1111, %v1206
      %v1271 = vmax.f32 %v1112, %v1208
      %v1272 = vmax.f32 %v1113, %v1210
      %v1273 = vmax.f32 %v1114, %v1207
      %v1274 = vmax.f32 %v1115, %v1209
      %vm1275 = vcmask 1045504
      %v1276 = vrot.slane %v1084, 2
      %v1277 = vrot.slane %v1086, 2
      %v1278 = vsel %vm1275, %v1276, %v1277
      %v1279 = vrot.slane %v1085, 2
      %v1280 = vrot.slane %v1087, 2
      %v1281 = vsel %vm1275, %v1279, %v1280
      %v1282 = vrot.slane %v1088, 2
      %v1283 = vsel %vm1275, %v1277, %v1282
      %v1284 = vrot.slane %v1089, 2
      %v1285 = vsel %vm1275, %v1280, %v1284
      %v1286 = vrot.slane %v1090, 2
      %v1287 = vsel %vm1275, %v1282, %v1286
      %v1288 = vrot.slane %v1091, 2
      %v1289 = vsel %vm1275, %v1284, %v1288
      %v1290 = vrot.slane %v1092, 2
      %v1291 = vsel %vm1275, %v1286, %v1290
      %v1292 = vrot.slane %v1093, 2
      %v1293 = vsel %vm1275, %v1288, %v1292
      %v1294 = vrot.slane %v1094, 2
      %v1295 = vsel %vm1275, %v1290, %v1294
      %v1296 = vrot.slane %v1095, 2
      %v1297 = vsel %vm1275, %v1292, %v1296
      %v1298 = vrot.slane %v1096, 2
      %v1299 = vsel %vm1275, %v1294, %v1298
      %v1300 = vrot.slane %v1097, 2
      %v1301 = vsel %vm1275, %v1296, %v1300
      %v1302 = vrot.slane %v1098, 2
      %v1303 = vsel %vm1275, %v1298, %v1302
      %v1304 = vrot.slane %v1099, 2
      %v1305 = vsel %vm1275, %v1300, %v1304
      %v1306 = vrot.slane %v1100, 2
      %v1307 = vsel %vm1275, %v1302, %v1306
      %v1308 = vrot.slane %v1101, 2
      %v1309 = vsel %vm1275, %v1304, %v1308
      %v1310 = vrot.slane %v1102, 2
      %v1311 = vsel %vm1275, %v1306, %v1310
      %v1312 = vrot.slane %v1103, 2
      %v1313 = vsel %vm1275, %v1308, %v1312
      %v1314 = vrot.slane %v1104, 2
      %v1315 = vsel %vm1275, %v1310, %v1314
      %v1316 = vrot.slane %v1105, 2
      %v1317 = vsel %vm1275, %v1312, %v1316
      %v1318 = vrot.slane %v1106, 2
      %v1319 = vsel %vm1275, %v1314, %v1318
      %v1320 = vrot.slane %v1107, 2
      %v1321 = vsel %vm1275, %v1316, %v1320
      %v1322 = vrot.slane %v1108, 2
      %v1323 = vsel %vm1275, %v1318, %v1322
      %v1324 = vrot.slane %v1109, 2
      %v1325 = vsel %vm1275, %v1320, %v1324
      %v1326 = vrot.slane %v1110, 2
      %v1327 = vsel %vm1275, %v1322, %v1326
      %v1328 = vrot.slane %v1111, 2
      %v1329 = vsel %vm1275, %v1324, %v1328
      %v1330 = vrot.slane %v1112, 2
      %v1331 = vsel %vm1275, %v1326, %v1330
      %v1332 = vrot.slane %v1113, 2
      %v1333 = vsel %vm1275, %v1328, %v1332
      %v1334 = vrot.slane %v1114, 2
      %v1335 = vsel %vm1275, %v1330, %v1334
      %v1336 = vrot.slane %v1115, 2
      %v1337 = vsel %vm1275, %v1332, %v1336
      %v1370 = vmax.f32 %v1243, %v1278
      %v1371 = vmax.f32 %v1244, %v1281
      %v1372 = vmax.f32 %v1245, %v1283
      %v1373 = vmax.f32 %v1246, %v1285
      %v1374 = vmax.f32 %v1247, %v1287
      %v1375 = vmax.f32 %v1248, %v1289
      %v1376 = vmax.f32 %v1249, %v1291
      %v1377 = vmax.f32 %v1250, %v1293
      %v1378 = vmax.f32 %v1251, %v1295
      %v1379 = vmax.f32 %v1252, %v1297
      %v1380 = vmax.f32 %v1253, %v1299
      %v1381 = vmax.f32 %v1254, %v1301
      %v1382 = vmax.f32 %v1255, %v1303
      %v1383 = vmax.f32 %v1256, %v1305
      %v1384 = vmax.f32 %v1257, %v1307
      %v1385 = vmax.f32 %v1258, %v1309
      %v1386 = vmax.f32 %v1259, %v1311
      %v1387 = vmax.f32 %v1260, %v1313
      %v1388 = vmax.f32 %v1261, %v1315
      %v1389 = vmax.f32 %v1262, %v1317
      %v1390 = vmax.f32 %v1263, %v1319
      %v1391 = vmax.f32 %v1264, %v1321
      %v1392 = vmax.f32 %v1265, %v1323
      %v1393 = vmax.f32 %v1266, %v1325
      %v1394 = vmax.f32 %v1267, %v1327
      %v1395 = vmax.f32 %v1268, %v1329
      %v1396 = vmax.f32 %v1269, %v1331
      %v1397 = vmax.f32 %v1270, %v1333
      %v1398 = vmax.f32 %v1271, %v1335
      %v1399 = vmax.f32 %v1272, %v1337
      %v1400 = vmax.f32 %v1273, %v1334
      %v1401 = vmax.f32 %v1274, %v1336
      %v1402 = vpack.c.bf16 %v1372, %v1370
      %v1403 = vpack.c.bf16 %v1373, %v1371
      %v1404 = vpack.c.bf16 %v1376, %v1374
      %v1405 = vpack.c.bf16 %v1377, %v1375
      %v1406 = vpack.c.bf16 %v1380, %v1378
      %v1407 = vpack.c.bf16 %v1381, %v1379
      %v1408 = vpack.c.bf16 %v1384, %v1382
      %v1409 = vpack.c.bf16 %v1385, %v1383
      %v1410 = vpack.c.bf16 %v1388, %v1386
      %v1411 = vpack.c.bf16 %v1389, %v1387
      %v1412 = vpack.c.bf16 %v1392, %v1390
      %v1413 = vpack.c.bf16 %v1393, %v1391
      %v1414 = vpack.c.bf16 %v1396, %v1394
      %v1415 = vpack.c.bf16 %v1397, %v1395
      %v1416 = vpack.c.bf16 %v1400, %v1398
      %v1417 = vpack.c.bf16 %v1401, %v1399
      %v1418 = vld [vmem:[%s3] sm:$0xff]
      %v1419 = vld [vmem:[%s3 + $0x8] sm:$0xff]
      %v1420 = vld [vmem:[%s3 + $0x10] sm:$0xff]
      %v1421 = vld [vmem:[%s3 + $0x18] sm:$0xff]
      %v1422 = vld [vmem:[%s3 + $0x20] sm:$0xff]
      %v1423 = vld [vmem:[%s3 + $0x28] sm:$0xff]
      %v1424 = vld [vmem:[%s3 + $0x30] sm:$0xff]
      %v1425 = vld [vmem:[%s3 + $0x38] sm:$0xff]
      %v1426 = vld [vmem:[%s3 + $0x40] sm:$0xff]
      %v1427 = vld [vmem:[%s3 + $0x48] sm:$0xff]
      %v1428 = vld [vmem:[%s3 + $0x50] sm:$0xff]
      %v1429 = vld [vmem:[%s3 + $0x58] sm:$0xff]
      %v1430 = vld [vmem:[%s3 + $0x60] sm:$0xff]
      %v1431 = vld [vmem:[%s3 + $0x68] sm:$0xff]
      %v1432 = vld [vmem:[%s3 + $0x70] sm:$0xff]
      %v1433 = vld [vmem:[%s3 + $0x78] sm:$0xff]
      %v1434 = vld [vmem:[%s3 + $0x80] sm:$0xff]
      %v1435 = vld [vmem:[%s3 + $0x88] sm:$0xff]
      %v1436 = vld [vmem:[%s3 + $0x90] sm:$0xff]
      %v1437 = vld [vmem:[%s3 + $0x98] sm:$0xff]
      %v1438 = vld [vmem:[%s4] sm:$0x3]
      %v1440 = vlaneseq
      %v1441 = vshrl.u32 %v1440, 7
      %v1442 = vsub.s32 0, %v1441
      %v1443 = vrot.slane %v1438, %v1442
      %v1444 = vlaneseq
      %v1445 = vshrl.u32 %v1444, 7
      %v1446 = vsub.s32 1, %v1445
      %v1447 = vrot.slane %v1438, %v1446
      %v1470 = vunpack.c.l.b16 %v1418
      %v1471 = vunpack.c.h.b16 %v1418
      %v1472 = vunpack.c.l.b16 %v1419
      %v1473 = vunpack.c.h.b16 %v1419
      %v1474 = vunpack.c.l.b16 %v1420
      %v1475 = vunpack.c.h.b16 %v1420
      %v1476 = vunpack.c.l.b16 %v1421
      %v1477 = vunpack.c.h.b16 %v1421
      %v1478 = vunpack.c.l.b16 %v1422
      %v1479 = vunpack.c.h.b16 %v1422
      %v1480 = vunpack.c.l.b16 %v1423
      %v1481 = vunpack.c.h.b16 %v1423
      %v1482 = vunpack.c.l.b16 %v1424
      %v1483 = vunpack.c.h.b16 %v1424
      %v1484 = vunpack.c.l.b16 %v1425
      %v1485 = vunpack.c.h.b16 %v1425
      %v1486 = vunpack.c.l.b16 %v1426
      %v1487 = vunpack.c.h.b16 %v1426
      %v1488 = vunpack.c.l.b16 %v1427
      %v1489 = vunpack.c.h.b16 %v1427
      %v1490 = vunpack.c.l.b16 %v1428
      %v1491 = vunpack.c.h.b16 %v1428
      %v1492 = vunpack.c.l.b16 %v1429
      %v1493 = vunpack.c.h.b16 %v1429
      %v1494 = vunpack.c.l.b16 %v1430
      %v1495 = vunpack.c.h.b16 %v1430
      %v1496 = vunpack.c.l.b16 %v1431
      %v1497 = vunpack.c.h.b16 %v1431
      %v1498 = vunpack.c.l.b16 %v1432
      %v1499 = vunpack.c.h.b16 %v1432
      %v1500 = vunpack.c.l.b16 %v1433
      %v1501 = vunpack.c.h.b16 %v1433
      %v1502 = vunpack.c.l.b16 %v1434
      %v1503 = vunpack.c.h.b16 %v1434
      %v1504 = vunpack.c.l.b16 %v1435
      %v1505 = vunpack.c.h.b16 %v1435
      %v1506 = vunpack.c.l.b16 %v1436
      %v1507 = vunpack.c.h.b16 %v1436
      %v1508 = vunpack.c.l.b16 %v1437
      %v1509 = vunpack.c.h.b16 %v1437
      %v1510 = vpack.c.b16 %v1472, %v1470
      %v1511 = vpack.c.b16 %v1473, %v1471
      %v1512 = vpack.c.b16 %v1476, %v1474
      %v1513 = vpack.c.b16 %v1477, %v1475
      %v1514 = vpack.c.b16 %v1480, %v1478
      %v1515 = vpack.c.b16 %v1481, %v1479
      %v1516 = vpack.c.b16 %v1484, %v1482
      %v1517 = vpack.c.b16 %v1485, %v1483
      %v1518 = vpack.c.b16 %v1488, %v1486
      %v1519 = vpack.c.b16 %v1489, %v1487
      %v1520 = vpack.c.b16 %v1492, %v1490
      %v1521 = vpack.c.b16 %v1493, %v1491
      %v1522 = vpack.c.b16 %v1496, %v1494
      %v1523 = vpack.c.b16 %v1497, %v1495
      %v1524 = vpack.c.b16 %v1500, %v1498
      %v1525 = vpack.c.b16 %v1501, %v1499
      %v1526 = vpack.c.b16 %v1504, %v1502
      %v1527 = vpack.c.b16 %v1505, %v1503
      %v1528 = vpack.c.b16 %v1508, %v1506
      %v1529 = vpack.c.b16 %v1509, %v1507
      %vm1550 = vcmask 261120
      %v1552 = vsel %vm1550, %v1403, 0
      %v1555 = vsel %vm1550, %v1405, 0
      %v1558 = vsel %vm1550, %v1407, 0
      %v1561 = vsel %vm1550, %v1409, 0
      %v1564 = vsel %vm1550, %v1411, 0
      %v1567 = vsel %vm1550, %v1413, 0
      %v1570 = vsel %vm1550, %v1415, 0
      %v1573 = vsel %vm1550, %v1417, 0
      %1575 = vmatprep.subr.bf16.mxu0 %v1511
      %1576 = vmatpush1.bf16.msra.mxu0 %v1510
      %1577 = vmatprep.subr.bf16.mxu0 %v1513
      %1578 = vmatpush1.bf16.msra.mxu0 %v1512
      %1579 = vmatprep.subr.bf16.mxu0 %v1515
      %1580 = vmatpush1.bf16.msra.mxu0 %v1514
      %1581 = vmatprep.subr.bf16.mxu0 %v1517
      %1582 = vmatpush1.bf16.msra.mxu0 %v1516
      %1583 = vmatprep.subr.bf16.mxu0 %v1519
      %1584 = vmatpush1.bf16.msra.mxu0 %v1518
      %1585 = vmatprep.subr.bf16.mxu0 %v1521
      %1586 = vmatpush1.bf16.msra.mxu0 %v1520
      %1587 = vmatprep.subr.bf16.mxu0 %v1523
      %1588 = vmatpush1.bf16.msra.mxu0 %v1522
      %1589 = vmatprep.subr.bf16.mxu0 %v1525
      %1590 = vmatpush1.bf16.msra.mxu0 %v1524
      %1591 = vmatprep.subr.bf16.mxu0 %v1527
      %1592 = vmatpush1.bf16.msra.mxu0 %v1526
      %1593 = vmatprep.subr.bf16.mxu0 %v1529
      %1594 = vmatpush1.bf16.msra.mxu0 %v1528
      %1595 = vmatprep.subr.bf16.mxu0 0
      %1596 = vmatpush1.bf16.msra.mxu0 0
      %1597 = vmatprep.subr.bf16.mxu0 0
      %1598 = vmatpush1.bf16.msra.mxu0 0
      %1599 = vmatprep.subr.bf16.mxu0 0
      %1600 = vmatpush1.bf16.msra.mxu0 0
      %1601 = vmatprep.subr.bf16.mxu0 0
      %1602 = vmatpush1.bf16.msra.mxu0 0
      %1603 = vmatprep.subr.bf16.mxu0 0
      %1604 = vmatpush1.bf16.msra.mxu0 0
      %1605 = vmatprep.subr.bf16.mxu0 0
      %1606 = vmatpush1.bf16.msra.mxu0 0
      %1607 = vmatprep.mubr.bf16.mxu0 %v1552
      %1608 = vmatmul.mubr.bf16.gmra.mrb[0].mxu0 %v1402
      %v1609 = vpop.f32.mrb[0].mxu0
      %v1610 = vadd.f32 %v1443, %v1609
      %v1611 = vpop.f32.mrb[0].mxu0
      %v1612 = vadd.f32 %v1447, %v1611
      %v1613 = vpop.f32.mrb[0].mxu0
      %v1614 = vadd.f32 %v1443, %v1613
      %v1615 = vpop.f32.mrb[0].mxu0
      %v1616 = vadd.f32 %v1447, %v1615
      %1617 = vmatprep.mubr.bf16.mxu0 %v1555
      %1618 = vmatmul.mubr.bf16.gmra.mrb[0].mxu0 %v1404
      %v1619 = vpop.f32.mrb[0].mxu0
      %v1620 = vadd.f32 %v1443, %v1619
      %v1621 = vpop.f32.mrb[0].mxu0
      %v1622 = vadd.f32 %v1447, %v1621
      %v1623 = vpop.f32.mrb[0].mxu0
      %v1624 = vadd.f32 %v1443, %v1623
      %v1625 = vpop.f32.mrb[0].mxu0
      %v1626 = vadd.f32 %v1447, %v1625
      %1627 = vmatprep.mubr.bf16.mxu0 %v1558
      %1628 = vmatmul.mubr.bf16.gmra.mrb[0].mxu0 %v1406
      %v1629 = vpop.f32.mrb[0].mxu0
      %v1630 = vadd.f32 %v1443, %v1629
      %v1631 = vpop.f32.mrb[0].mxu0
      %v1632 = vadd.f32 %v1447, %v1631
      %v1633 = vpop.f32.mrb[0].mxu0
      %v1634 = vadd.f32 %v1443, %v1633
      %v1635 = vpop.f32.mrb[0].mxu0
      %v1636 = vadd.f32 %v1447, %v1635
      %1637 = vmatprep.mubr.bf16.mxu0 %v1561
      %1638 = vmatmul.mubr.bf16.gmra.mrb[0].mxu0 %v1408
      %v1639 = vpop.f32.mrb[0].mxu0
      %v1640 = vadd.f32 %v1443, %v1639
      %v1641 = vpop.f32.mrb[0].mxu0
      %v1642 = vadd.f32 %v1447, %v1641
      %v1643 = vpop.f32.mrb[0].mxu0
      %v1644 = vadd.f32 %v1443, %v1643
      %v1645 = vpop.f32.mrb[0].mxu0
      %v1646 = vadd.f32 %v1447, %v1645
      %1647 = vmatprep.mubr.bf16.mxu0 %v1564
      %1648 = vmatmul.mubr.bf16.gmra.mrb[0].mxu0 %v1410
      %v1649 = vpop.f32.mrb[0].mxu0
      %v1650 = vadd.f32 %v1443, %v1649
      %v1651 = vpop.f32.mrb[0].mxu0
      %v1652 = vadd.f32 %v1447, %v1651
      %v1653 = vpop.f32.mrb[0].mxu0
      %v1654 = vadd.f32 %v1443, %v1653
      %v1655 = vpop.f32.mrb[0].mxu0
      %v1656 = vadd.f32 %v1447, %v1655
      %1657 = vmatprep.mubr.bf16.mxu0 %v1567
      %1658 = vmatmul.mubr.bf16.gmra.mrb[0].mxu0 %v1412
      %v1659 = vpop.f32.mrb[0].mxu0
      %v1660 = vadd.f32 %v1443, %v1659
      %v1661 = vpop.f32.mrb[0].mxu0
      %v1662 = vadd.f32 %v1447, %v1661
      %v1663 = vpop.f32.mrb[0].mxu0
      %v1664 = vadd.f32 %v1443, %v1663
      %v1665 = vpop.f32.mrb[0].mxu0
      %v1666 = vadd.f32 %v1447, %v1665
      %1667 = vmatprep.mubr.bf16.mxu0 %v1570
      %1668 = vmatmul.mubr.bf16.gmra.mrb[0].mxu0 %v1414
      %v1669 = vpop.f32.mrb[0].mxu0
      %v1670 = vadd.f32 %v1443, %v1669
      %v1671 = vpop.f32.mrb[0].mxu0
      %v1672 = vadd.f32 %v1447, %v1671
      %v1673 = vpop.f32.mrb[0].mxu0
      %v1674 = vadd.f32 %v1443, %v1673
      %v1675 = vpop.f32.mrb[0].mxu0
      %v1676 = vadd.f32 %v1447, %v1675
      %1677 = vmatprep.mubr.bf16.mxu0 %v1573
      %1678 = vmatmul.mubr.bf16.gmra.mrb[0].mxu0 %v1416
      %v1679 = vpop.f32.mrb[0].mxu0
      %v1680 = vadd.f32 %v1443, %v1679
      %v1681 = vpop.f32.mrb[0].mxu0
      %v1682 = vadd.f32 %v1447, %v1681
      %v1683 = vpop.f32.mrb[0].mxu0
      %v1684 = vadd.f32 %v1443, %v1683
      %v1685 = vpop.f32.mrb[0].mxu0
      %v1686 = vadd.f32 %v1447, %v1685
      %1687 = vdwg.mxu0
      %v1688 = vmax.f32 %v1610, 0.0
      %v1689 = vmax.f32 %v1612, 0.0
      %v1690 = vmax.f32 %v1614, 0.0
      %v1691 = vmax.f32 %v1616, 0.0
      %v1692 = vmax.f32 %v1620, 0.0
      %v1693 = vmax.f32 %v1622, 0.0
      %v1694 = vmax.f32 %v1624, 0.0
      %v1695 = vmax.f32 %v1626, 0.0
      %v1696 = vmax.f32 %v1630, 0.0
      %v1697 = vmax.f32 %v1632, 0.0
      %v1698 = vmax.f32 %v1634, 0.0
      %v1699 = vmax.f32 %v1636, 0.0
      %v1700 = vmax.f32 %v1640, 0.0
      %v1701 = vmax.f32 %v1642, 0.0
      %v1702 = vmax.f32 %v1644, 0.0
      %v1703 = vmax.f32 %v1646, 0.0
      %v1704 = vmax.f32 %v1650, 0.0
      %v1705 = vmax.f32 %v1652, 0.0
      %v1706 = vmax.f32 %v1654, 0.0
      %v1707 = vmax.f32 %v1656, 0.0
      %v1708 = vmax.f32 %v1660, 0.0
      %v1709 = vmax.f32 %v1662, 0.0
      %v1710 = vmax.f32 %v1664, 0.0
      %v1711 = vmax.f32 %v1666, 0.0
      %v1712 = vmax.f32 %v1670, 0.0
      %v1713 = vmax.f32 %v1672, 0.0
      %v1714 = vmax.f32 %v1674, 0.0
      %v1715 = vmax.f32 %v1676, 0.0
      %v1716 = vmax.f32 %v1680, 0.0
      %v1717 = vmax.f32 %v1682, 0.0
      %v1718 = vmax.f32 %v1684, 0.0
      %v1719 = vmax.f32 %v1686, 0.0
      %v1752 = vrot.slane %v1688, 2
      %v1753 = vrot.slane %v1690, 2
      %v1754 = vsel %vm1275, %v1752, %v1753
      %v1755 = vrot.slane %v1689, 2
      %v1756 = vrot.slane %v1691, 2
      %v1757 = vsel %vm1275, %v1755, %v1756
      %v1758 = vrot.slane %v1692, 2
      %v1759 = vsel %vm1275, %v1753, %v1758
      %v1760 = vrot.slane %v1693, 2
      %v1761 = vsel %vm1275, %v1756, %v1760
      %v1762 = vrot.slane %v1694, 2
      %v1763 = vsel %vm1275, %v1758, %v1762
      %v1764 = vrot.slane %v1695, 2
      %v1765 = vsel %vm1275, %v1760, %v1764
      %v1766 = vrot.slane %v1696, 2
      %v1767 = vsel %vm1275, %v1762, %v1766
      %v1768 = vrot.slane %v1697, 2
      %v1769 = vsel %vm1275, %v1764, %v1768
      %v1770 = vrot.slane %v1698, 2
      %v1771 = vsel %vm1275, %v1766, %v1770
      %v1772 = vrot.slane %v1699, 2
      %v1773 = vsel %vm1275, %v1768, %v1772
      %v1774 = vrot.slane %v1700, 2
      %v1775 = vsel %vm1275, %v1770, %v1774
      %v1776 = vrot.slane %v1701, 2
      %v1777 = vsel %vm1275, %v1772, %v1776
      %v1778 = vrot.slane %v1702, 2
      %v1779 = vsel %vm1275, %v1774, %v1778
      %v1780 = vrot.slane %v1703, 2
      %v1781 = vsel %vm1275, %v1776, %v1780
      %v1782 = vrot.slane %v1704, 2
      %v1783 = vsel %vm1275, %v1778, %v1782
      %v1784 = vrot.slane %v1705, 2
      %v1785 = vsel %vm1275, %v1780, %v1784
      %v1786 = vrot.slane %v1706, 2
      %v1787 = vsel %vm1275, %v1782, %v1786
      %v1788 = vrot.slane %v1707, 2
      %v1789 = vsel %vm1275, %v1784, %v1788
      %v1790 = vrot.slane %v1708, 2
      %v1791 = vsel %vm1275, %v1786, %v1790
      %v1792 = vrot.slane %v1709, 2
      %v1793 = vsel %vm1275, %v1788, %v1792
      %v1794 = vrot.slane %v1710, 2
      %v1795 = vsel %vm1275, %v1790, %v1794
      %v1796 = vrot.slane %v1711, 2
      %v1797 = vsel %vm1275, %v1792, %v1796
      %v1798 = vrot.slane %v1712, 2
      %v1799 = vsel %vm1275, %v1794, %v1798
      %v1800 = vrot.slane %v1713, 2
      %v1801 = vsel %vm1275, %v1796, %v1800
      %v1802 = vrot.slane %v1714, 2
      %v1803 = vsel %vm1275, %v1798, %v1802
      %v1804 = vrot.slane %v1715, 2
      %v1805 = vsel %vm1275, %v1800, %v1804
      %v1806 = vrot.slane %v1716, 2
      %v1807 = vsel %vm1275, %v1802, %v1806
      %v1808 = vrot.slane %v1717, 2
      %v1809 = vsel %vm1275, %v1804, %v1808
      %v1810 = vrot.slane %v1718, 2
      %v1811 = vsel %vm1275, %v1806, %v1810
      %v1812 = vrot.slane %v1719, 2
      %v1813 = vsel %vm1275, %v1808, %v1812
      %v1846 = vmax.f32 %v1688, %v1754
      %v1847 = vmax.f32 %v1689, %v1757
      %v1848 = vmax.f32 %v1690, %v1759
      %v1849 = vmax.f32 %v1691, %v1761
      %v1850 = vmax.f32 %v1692, %v1763
      %v1851 = vmax.f32 %v1693, %v1765
      %v1852 = vmax.f32 %v1694, %v1767
      %v1853 = vmax.f32 %v1695, %v1769
      %v1854 = vmax.f32 %v1696, %v1771
      %v1855 = vmax.f32 %v1697, %v1773
      %v1856 = vmax.f32 %v1698, %v1775
      %v1857 = vmax.f32 %v1699, %v1777
      %v1858 = vmax.f32 %v1700, %v1779
      %v1859 = vmax.f32 %v1701, %v1781
      %v1860 = vmax.f32 %v1702, %v1783
      %v1861 = vmax.f32 %v1703, %v1785
      %v1862 = vmax.f32 %v1704, %v1787
      %v1863 = vmax.f32 %v1705, %v1789
      %v1864 = vmax.f32 %v1706, %v1791
      %v1865 = vmax.f32 %v1707, %v1793
      %v1866 = vmax.f32 %v1708, %v1795
      %v1867 = vmax.f32 %v1709, %v1797
      %v1868 = vmax.f32 %v1710, %v1799
      %v1869 = vmax.f32 %v1711, %v1801
      %v1870 = vmax.f32 %v1712, %v1803
      %v1871 = vmax.f32 %v1713, %v1805
      %v1872 = vmax.f32 %v1714, %v1807
      %v1873 = vmax.f32 %v1715, %v1809
      %v1874 = vmax.f32 %v1716, %v1811
      %v1875 = vmax.f32 %v1717, %v1813
      %v1876 = vmax.f32 %v1718, %v1810
      %v1877 = vmax.f32 %v1719, %v1812
      %v1878 = vpack.c.bf16 %v1848, %v1846
      %v1879 = vpack.c.bf16 %v1849, %v1847
      %v1880 = vpack.c.bf16 %v1852, %v1850
      %v1881 = vpack.c.bf16 %v1853, %v1851
      %v1882 = vpack.c.bf16 %v1856, %v1854
      %v1883 = vpack.c.bf16 %v1857, %v1855
      %v1884 = vpack.c.bf16 %v1860, %v1858
      %v1885 = vpack.c.bf16 %v1861, %v1859
      %v1886 = vpack.c.bf16 %v1864, %v1862
      %v1887 = vpack.c.bf16 %v1865, %v1863
      %v1888 = vpack.c.bf16 %v1868, %v1866
      %v1889 = vpack.c.bf16 %v1869, %v1867
      %v1890 = vpack.c.bf16 %v1872, %v1870
      %v1891 = vpack.c.bf16 %v1873, %v1871
      %v1892 = vpack.c.bf16 %v1876, %v1874
      %v1893 = vpack.c.bf16 %v1877, %v1875
      %v1894 = vld [vmem:[%s5] sm:$0xff]
      %v1895 = vld [vmem:[%s5 + $0x8] sm:$0xff]
      %v1896 = vld [vmem:[%s5 + $0x10] sm:$0xff]
      %v1897 = vld [vmem:[%s5 + $0x18] sm:$0xff]
      %v1898 = vld [vmem:[%s5 + $0x20] sm:$0xff]
      %v1899 = vld [vmem:[%s5 + $0x28] sm:$0xff]
      %v1900 = vld [vmem:[%s5 + $0x30] sm:$0xff]
      %v1901 = vld [vmem:[%s5 + $0x38] sm:$0xff]
      %v1902 = vld [vmem:[%s5 + $0x40] sm:$0xff]
      %v1903 = vld [vmem:[%s5 + $0x48] sm:$0xff]
      %v1904 = vld [vmem:[%s5 + $0x50] sm:$0xff]
      %v1905 = vld [vmem:[%s5 + $0x58] sm:$0xff]
      %v1906 = vld [vmem:[%s5 + $0x60] sm:$0xff]
      %v1907 = vld [vmem:[%s5 + $0x68] sm:$0xff]
      %v1908 = vld [vmem:[%s5 + $0x70] sm:$0xff]
      %v1909 = vld [vmem:[%s5 + $0x78] sm:$0xff]
      %v1910 = vld [vmem:[%s5 + $0x80] sm:$0xff]
      %v1911 = vld [vmem:[%s5 + $0x88] sm:$0xff]
      %v1912 = vld [vmem:[%s5 + $0x90] sm:$0xff]
      %v1913 = vld [vmem:[%s5 + $0x98] sm:$0xff]
      %v1914 = vld [vmem:[%s6] sm:$0x3]
      %v1916 = vlaneseq
      %v1917 = vshrl.u32 %v1916, 7
      %v1918 = vsub.s32 0, %v1917
      %v1919 = vrot.slane %v1914, %v1918
      %v1920 = vlaneseq
      %v1921 = vshrl.u32 %v1920, 7
      %v1922 = vsub.s32 1, %v1921
      %v1923 = vrot.slane %v1914, %v1922
      %v1946 = vunpack.c.l.b16 %v1894
      %v1947 = vunpack.c.h.b16 %v1894
      %v1948 = vunpack.c.l.b16 %v1895
      %v1949 = vunpack.c.h.b16 %v1895
      %v1950 = vunpack.c.l.b16 %v1896
      %v1951 = vunpack.c.h.b16 %v1896
      %v1952 = vunpack.c.l.b16 %v1897
      %v1953 = vunpack.c.h.b16 %v1897
      %v1954 = vunpack.c.l.b16 %v1898
      %v1955 = vunpack.c.h.b16 %v1898
      %v1956 = vunpack.c.l.b16 %v1899
      %v1957 = vunpack.c.h.b16 %v1899
      %v1958 = vunpack.c.l.b16 %v1900
      %v1959 = vunpack.c.h.b16 %v1900
      %v1960 = vunpack.c.l.b16 %v1901
      %v1961 = vunpack.c.h.b16 %v1901
      %v1962 = vunpack.c.l.b16 %v1902
      %v1963 = vunpack.c.h.b16 %v1902
      %v1964 = vunpack.c.l.b16 %v1903
      %v1965 = vunpack.c.h.b16 %v1903
      %v1966 = vunpack.c.l.b16 %v1904
      %v1967 = vunpack.c.h.b16 %v1904
      %v1968 = vunpack.c.l.b16 %v1905
      %v1969 = vunpack.c.h.b16 %v1905
      %v1970 = vunpack.c.l.b16 %v1906
      %v1971 = vunpack.c.h.b16 %v1906
      %v1972 = vunpack.c.l.b16 %v1907
      %v1973 = vunpack.c.h.b16 %v1907
      %v1974 = vunpack.c.l.b16 %v1908
      %v1975 = vunpack.c.h.b16 %v1908
      %v1976 = vunpack.c.l.b16 %v1909
      %v1977 = vunpack.c.h.b16 %v1909
      %v1978 = vunpack.c.l.b16 %v1910
      %v1979 = vunpack.c.h.b16 %v1910
      %v1980 = vunpack.c.l.b16 %v1911
      %v1981 = vunpack.c.h.b16 %v1911
      %v1982 = vunpack.c.l.b16 %v1912
      %v1983 = vunpack.c.h.b16 %v1912
      %v1984 = vunpack.c.l.b16 %v1913
      %v1985 = vunpack.c.h.b16 %v1913
      %v1986 = vpack.c.b16 %v1948, %v1946
      %v1987 = vpack.c.b16 %v1949, %v1947
      %v1988 = vpack.c.b16 %v1952, %v1950
      %v1989 = vpack.c.b16 %v1953, %v1951
      %v1990 = vpack.c.b16 %v1956, %v1954
      %v1991 = vpack.c.b16 %v1957, %v1955
      %v1992 = vpack.c.b16 %v1960, %v1958
      %v1993 = vpack.c.b16 %v1961, %v1959
      %v1994 = vpack.c.b16 %v1964, %v1962
      %v1995 = vpack.c.b16 %v1965, %v1963
      %v1996 = vpack.c.b16 %v1968, %v1966
      %v1997 = vpack.c.b16 %v1969, %v1967
      %v1998 = vpack.c.b16 %v1972, %v1970
      %v1999 = vpack.c.b16 %v1973, %v1971
      %v2000 = vpack.c.b16 %v1976, %v1974
      %v2001 = vpack.c.b16 %v1977, %v1975
      %v2002 = vpack.c.b16 %v1980, %v1978
      %v2003 = vpack.c.b16 %v1981, %v1979
      %v2004 = vpack.c.b16 %v1984, %v1982
      %v2005 = vpack.c.b16 %v1985, %v1983
      %v2027 = vsel %vm1550, %v1879, 0
      %v2030 = vsel %vm1550, %v1881, 0
      %v2033 = vsel %vm1550, %v1883, 0
      %v2036 = vsel %vm1550, %v1885, 0
      %v2039 = vsel %vm1550, %v1887, 0
      %v2042 = vsel %vm1550, %v1889, 0
      %v2045 = vsel %vm1550, %v1891, 0
      %v2048 = vsel %vm1550, %v1893, 0
      %2050 = vmatprep.subr.bf16.mxu0 %v1987
      %2051 = vmatpush1.bf16.msra.mxu0 %v1986
      %2052 = vmatprep.subr.bf16.mxu0 %v1989
      %2053 = vmatpush1.bf16.msra.mxu0 %v1988
      %2054 = vmatprep.subr.bf16.mxu0 %v1991
      %2055 = vmatpush1.bf16.msra.mxu0 %v1990
      %2056 = vmatprep.subr.bf16.mxu0 %v1993
      %2057 = vmatpush1.bf16.msra.mxu0 %v1992
      %2058 = vmatprep.subr.bf16.mxu0 %v1995
      %2059 = vmatpush1.bf16.msra.mxu0 %v1994
      %2060 = vmatprep.subr.bf16.mxu0 %v1997
      %2061 = vmatpush1.bf16.msra.mxu0 %v1996
      %2062 = vmatprep.subr.bf16.mxu0 %v1999
      %2063 = vmatpush1.bf16.msra.mxu0 %v1998
      %2064 = vmatprep.subr.bf16.mxu0 %v2001
      %2065 = vmatpush1.bf16.msra.mxu0 %v2000
      %2066 = vmatprep.subr.bf16.mxu0 %v2003
      %2067 = vmatpush1.bf16.msra.mxu0 %v2002
      %2068 = vmatprep.subr.bf16.mxu0 %v2005
      %2069 = vmatpush1.bf16.msra.mxu0 %v2004
      %2070 = vmatprep.subr.bf16.mxu0 0
      %2071 = vmatpush1.bf16.msra.mxu0 0
      %2072 = vmatprep.subr.bf16.mxu0 0
      %2073 = vmatpush1.bf16.msra.mxu0 0
      %2074 = vmatprep.subr.bf16.mxu0 0
      %2075 = vmatpush1.bf16.msra.mxu0 0
      %2076 = vmatprep.subr.bf16.mxu0 0
      %2077 = vmatpush1.bf16.msra.mxu0 0
      %2078 = vmatprep.subr.bf16.mxu0 0
      %2079 = vmatpush1.bf16.msra.mxu0 0
      %2080 = vmatprep.subr.bf16.mxu0 0
      %2081 = vmatpush1.bf16.msra.mxu0 0
      %2082 = vmatprep.mubr.bf16.mxu0 %v2027
      %2083 = vmatmul.mubr.bf16.gmra.mrb[0].mxu0 %v1878
      %v2084 = vpop.f32.mrb[0].mxu0
      %v2085 = vadd.f32 %v1919, %v2084
      %v2086 = vpop.f32.mrb[0].mxu0
      %v2087 = vadd.f32 %v1923, %v2086
      %v2088 = vpop.f32.mrb[0].mxu0
      %v2089 = vadd.f32 %v1919, %v2088
      %v2090 = vpop.f32.mrb[0].mxu0
      %v2091 = vadd.f32 %v1923, %v2090
      %2092 = vmatprep.mubr.bf16.mxu0 %v2030
      %2093 = vmatmul.mubr.bf16.gmra.mrb[0].mxu0 %v1880
      %v2094 = vpop.f32.mrb[0].mxu0
      %v2095 = vadd.f32 %v1919, %v2094
      %v2096 = vpop.f32.mrb[0].mxu0
      %v2097 = vadd.f32 %v1923, %v2096
      %v2098 = vpop.f32.mrb[0].mxu0
      %v2099 = vadd.f32 %v1919, %v2098
      %v2100 = vpop.f32.mrb[0].mxu0
      %v2101 = vadd.f32 %v1923, %v2100
      %2102 = vmatprep.mubr.bf16.mxu0 %v2033
      %2103 = vmatmul.mubr.bf16.gmra.mrb[0].mxu0 %v1882
      %v2104 = vpop.f32.mrb[0].mxu0
      %v2105 = vadd.f32 %v1919, %v2104
      %v2106 = vpop.f32.mrb[0].mxu0
      %v2107 = vadd.f32 %v1923, %v2106
      %v2108 = vpop.f32.mrb[0].mxu0
      %v2109 = vadd.f32 %v1919, %v2108
      %v2110 = vpop.f32.mrb[0].mxu0
      %v2111 = vadd.f32 %v1923, %v2110
      %2112 = vmatprep.mubr.bf16.mxu0 %v2036
      %2113 = vmatmul.mubr.bf16.gmra.mrb[0].mxu0 %v1884
      %v2114 = vpop.f32.mrb[0].mxu0
      %v2115 = vadd.f32 %v1919, %v2114
      %v2116 = vpop.f32.mrb[0].mxu0
      %v2117 = vadd.f32 %v1923, %v2116
      %v2118 = vpop.f32.mrb[0].mxu0
      %v2119 = vadd.f32 %v1919, %v2118
      %v2120 = vpop.f32.mrb[0].mxu0
      %v2121 = vadd.f32 %v1923, %v2120
      %2122 = vmatprep.mubr.bf16.mxu0 %v2039
      %2123 = vmatmul.mubr.bf16.gmra.mrb[0].mxu0 %v1886
      %v2124 = vpop.f32.mrb[0].mxu0
      %v2125 = vadd.f32 %v1919, %v2124
      %v2126 = vpop.f32.mrb[0].mxu0
      %v2127 = vadd.f32 %v1923, %v2126
      %v2128 = vpop.f32.mrb[0].mxu0
      %v2129 = vadd.f32 %v1919, %v2128
      %v2130 = vpop.f32.mrb[0].mxu0
      %v2131 = vadd.f32 %v1923, %v2130
      %2132 = vmatprep.mubr.bf16.mxu0 %v2042
      %2133 = vmatmul.mubr.bf16.gmra.mrb[0].mxu0 %v1888
      %v2134 = vpop.f32.mrb[0].mxu0
      %v2135 = vadd.f32 %v1919, %v2134
      %v2136 = vpop.f32.mrb[0].mxu0
      %v2137 = vadd.f32 %v1923, %v2136
      %v2138 = vpop.f32.mrb[0].mxu0
      %v2139 = vadd.f32 %v1919, %v2138
      %v2140 = vpop.f32.mrb[0].mxu0
      %v2141 = vadd.f32 %v1923, %v2140
      %2142 = vmatprep.mubr.bf16.mxu0 %v2045
      %2143 = vmatmul.mubr.bf16.gmra.mrb[0].mxu0 %v1890
      %v2144 = vpop.f32.mrb[0].mxu0
      %v2145 = vadd.f32 %v1919, %v2144
      %v2146 = vpop.f32.mrb[0].mxu0
      %v2147 = vadd.f32 %v1923, %v2146
      %v2148 = vpop.f32.mrb[0].mxu0
      %v2149 = vadd.f32 %v1919, %v2148
      %v2150 = vpop.f32.mrb[0].mxu0
      %v2151 = vadd.f32 %v1923, %v2150
      %2152 = vmatprep.mubr.bf16.mxu0 %v2048
      %2153 = vmatmul.mubr.bf16.gmra.mrb[0].mxu0 %v1892
      %v2154 = vpop.f32.mrb[0].mxu0
      %v2155 = vadd.f32 %v1919, %v2154
      %v2156 = vpop.f32.mrb[0].mxu0
      %v2157 = vadd.f32 %v1923, %v2156
      %v2158 = vpop.f32.mrb[0].mxu0
      %v2159 = vadd.f32 %v1919, %v2158
      %v2160 = vpop.f32.mrb[0].mxu0
      %v2161 = vadd.f32 %v1923, %v2160
      %2162 = vdwg.mxu0
      %v2163 = vmul.f32 %v2085, %v2087
      %v2164 = vmul.f32 %v2089, %v2091
      %v2165 = vmul.f32 %v2095, %v2097
      %v2166 = vmul.f32 %v2099, %v2101
      %v2167 = vmul.f32 %v2105, %v2107
      %v2168 = vmul.f32 %v2109, %v2111
      %v2169 = vmul.f32 %v2115, %v2117
      %v2170 = vmul.f32 %v2119, %v2121
      %v2171 = vmul.f32 %v2125, %v2127
      %v2172 = vmul.f32 %v2129, %v2131
      %v2173 = vmul.f32 %v2135, %v2137
      %v2174 = vmul.f32 %v2139, %v2141
      %v2175 = vmul.f32 %v2145, %v2147
      %v2176 = vmul.f32 %v2149, %v2151
      %v2177 = vmul.f32 %v2155, %v2157
      %v2178 = vmul.f32 %v2159, %v2161
      %vm2179 = vcmask 1041408
      %v2180 = vsel %vm2179, %v2178, 0.0
      %v2181 = vld [vmem:[%s7] sm:$0xff]
      %2182 = vmatprep.subr.mxu0 0.0
      %2183 = vmatpush1.msra.mxu0 %v2163
      %2184 = vmatprep.subr.mxu0 0.0
      %2185 = vmatpush1.msra.mxu0 %v2164
      %2186 = vmatprep.subr.mxu0 0.0
      %2187 = vmatpush1.msra.mxu0 %v2165
      %2188 = vmatprep.subr.mxu0 0.0
      %2189 = vmatpush1.msra.mxu0 %v2166
      %2190 = vmatprep.subr.mxu0 0.0
      %2191 = vmatpush1.msra.mxu0 %v2167
      %2192 = vmatprep.subr.mxu0 0.0
      %2193 = vmatpush1.msra.mxu0 %v2168
      %2194 = vmatprep.subr.mxu0 0.0
      %2195 = vmatpush1.msra.mxu0 %v2169
      %2196 = vmatprep.subr.mxu0 0.0
      %2197 = vmatpush1.msra.mxu0 %v2170
      %2198 = vmatprep.subr.mxu0 0.0
      %2199 = vmatpush1.msra.mxu0 %v2171
      %2200 = vmatprep.subr.mxu0 0.0
      %2201 = vmatpush1.msra.mxu0 %v2172
      %2202 = vmatprep.subr.mxu0 0.0
      %2203 = vmatpush1.msra.mxu0 %v2173
      %2204 = vmatprep.subr.mxu0 0.0
      %2205 = vmatpush1.msra.mxu0 %v2174
      %2206 = vmatprep.subr.mxu0 0.0
      %2207 = vmatpush1.msra.mxu0 %v2175
      %2208 = vmatprep.subr.mxu0 0.0
      %2209 = vmatpush1.msra.mxu0 %v2176
      %2210 = vmatprep.subr.mxu0 0.0
      %2211 = vmatpush1.msra.mxu0 %v2177
      %2212 = vmatprep.subr.mxu0 0.0
      %2213 = vmatpush1.msra.mxu0 %v2180
      %2214 = vmatprep.subr.mxu0 0.0
      %2215 = vmatpush1.msra.mxu0 0.0
      %2216 = vmatprep.subr.mxu0 0.0
      %2217 = vmatpush1.msra.mxu0 0.0
      %2218 = vmatprep.subr.mxu0 0.0
      %2219 = vmatpush1.msra.mxu0 0.0
      %2220 = vmatprep.subr.mxu0 0.0
      %2221 = vmatpush1.msra.mxu0 0.0
      %2222 = vmatprep.subr.mxu0 0.0
      %2223 = vmatpush1.msra.mxu0 0.0
      %2224 = vmatprep.subr.mxu0 0.0
      %2225 = vmatpush1.msra.mxu0 0.0
      %2226 = vmatprep.subr.mxu0 0.0
      %2227 = vmatpush1.msra.mxu0 0.0
      %2228 = vmatprep.subr.mxu0 0.0
      %2229 = vmatpush1.msra.mxu0 0.0
      %2230 = vmatprep.subr.mxu0 0.0
      %2231 = vmatpush1.msra.mxu0 0.0
      %2232 = vmatprep.subr.mxu0 0.0
      %2233 = vmatpush1.msra.mxu0 0.0
      %2234 = vmatprep.subr.mxu0 0.0
      %2235 = vmatpush1.msra.mxu0 0.0
      %2236 = vmatprep.subr.mxu0 0.0
      %2237 = vmatpush1.msra.mxu0 0.0
      %2238 = vmatprep.subr.mxu0 0.0
      %2239 = vmatpush1.msra.mxu0 0.0
      %2240 = vmatprep.subr.mxu0 0.0
      %2241 = vmatpush1.msra.mxu0 0.0
      %2242 = vmatprep.subr.mxu0 0.0
      %2243 = vmatpush1.msra.mxu0 0.0
      %2244 = vmatprep.subr.mxu0 0.0
      %2245 = vmatpush1.msra.mxu0 0.0
      %2246 = vmatprep.mubr.f32.mxu0 0.0
      %2247 = vmatmul.mubr.f32.gmra.mrb[0].mxu0 %v2181
      %v2248 = vpop.f32.mrb[0].mxu0
      %v2249 = vadd.f32 0.0, %v2248
      %v2250 = vpop.f32.mrb[0].mxu0
      %2251 = vdwg.mxu0
      %v2252 = vxor.u32 %v2249, 2147483648
      %v2253 = vmul.f32 %v2252, 1.442695
      %v2254 = vpow.pop %v2253
      %v2255 = vadd.f32 %v2254, 1.0
      %v2256 = vrcp.pop %v2255
      %v2257 = vmul.f32 1.0, %v2256
      %2258 = vst [vmem:[%s305] sm:$0xff] %v2257
      %p2259 = scmp.lt.s32.totalorder %s19, 1
      %s2260 = scalar_select %p2259, %s19, 1
      %s2261 = smul.addr %s2260, 8
      %s2262 = scalar_lea.vmem %s8, %s2261
      // Predicated region
      $region53: #{devign_head.1} parent=51 // pred_check
        %p2263 = pneg %p210
      $region54: #{devign_head.1} parent=51 // pred_check_branch
        %2265 = sbr.rel (%p2263) target = $region56
      $region55: #{devign_head.1} parent=51 // pred_region
        _
      $region56: #{devign_head.1} parent=51 // pred_fallthru
        _
    $region52: #{devign_head.1} parent=5 // pred_fallthru
      _
    %p2266 = scmp.le.s32.totalorder 2, %s14
    // Predicated region
    $region57: #{devign_head.1} parent=5 // pred_check
      %p2267 = pneg %p2266
    $region58: #{devign_head.1} parent=5 // pred_check_branch
      %2269 = sbr.rel (%p2267) target = $region60
    $region59: #{devign_head.1} parent=5 // pred_region
      %s2270 = ssub.s32 %s14, 2
      // Predicated region
      $region61: #{devign_head.1} parent=59 // pred_check
        %p2271 = pneg %p216
      $region62: #{devign_head.1} parent=59 // pred_check_branch
        %2273 = sbr.rel (%p2271) target = $region64
      $region63: #{devign_head.1} parent=59 // pred_region
        %p2274 = scmp.lt.s32.totalorder %s20, 1
        %s2275 = scalar_select %p2274, %s20, 1
        %s2276 = smul.addr %s2275, 8
        %s2277 = scalar_lea.vmem %s8, %s2276
      $region64: #{devign_head.1} parent=59 // pred_fallthru
        _
    $region60: #{devign_head.1} parent=5 // pred_fallthru
      _
  $region6: #{devign_head.1} parent=0 // loop_footer
    %s18 = sadd.s32 1, %s14
  $region7: #{devign_head.1} parent=0 // loop_footer_branch
    %13 = sbr.rel target = $region3
  $region8: #{devign_head.1} parent=0 // loop_exit
    _

</llo_original>
